<compile_context>
chip_gen: v5e
topology: v5e:2x2
jax: 0.10.0
libtpu: 0.0.40
codegen_flags: <defaults>
</compile_context>

<pallas_src>
import functools
from math import prod

import jax
import jax.numpy as jnp
from jax.experimental import pallas as pl
from jax.experimental.pallas import tpu as pltpu

NEG_SLOPE = 0.02
BN_EPS = 1e-5
MXU_DTYPE = jnp.bfloat16  # MXU matmul operand dtype (f32 accumulation)


# --------------------------- in-kernel helpers ------------------------------

def _leaky(v):
    return jnp.where(v >= 0, v, NEG_SLOPE * v)


def _bn(v, leaky=False):
    # Training-mode BatchNorm2d: stats over (B, H, W), gamma=1, beta=0, biased
    # variance.  One-pass var = E[x^2] - E[x]^2 (activations are O(1) here).
    mean = jnp.mean(v, axis=(0, 1, 2), keepdims=True)
    msq = jnp.mean(v * v, axis=(0, 1, 2), keepdims=True)
    var = msq - mean * mean
    y = (v - mean) * jax.lax.rsqrt(var + BN_EPS)
    return _leaky(y) if leaky else y


def _bn_phases(phases, leaky=False):
    # Joint BatchNorm over the union of the 4 stride-2 output phases
    # (they together form the full (B, 2H, 2W, C) deconv output).
    n = 0
    s = None
    s2 = None
    for p in phases:
        ps = jnp.sum(p, axis=(0, 1, 2), keepdims=True)
        ps2 = jnp.sum(p * p, axis=(0, 1, 2), keepdims=True)
        s = ps if s is None else s + ps
        s2 = ps2 if s2 is None else s2 + ps2
        n += p.shape[0] * p.shape[1] * p.shape[2]
    mean = s / n
    var = s2 / n - mean * mean
    inv = jax.lax.rsqrt(var + BN_EPS)
    out = []
    for p in phases:
        y = (p - mean) * inv
        out.append(_leaky(y) if leaky else y)
    return out


def _fill_pad(pad_ref, v):
    # Write the interior; the 1-wide border of pad_ref must already be zero.
    B, H, W, C = v.shape
    pad_ref[:, 1:1 + H, 1:1 + W, :] = v


def _conv3x3(v, w_ref, pad_ref, patch_ref):
    # Stride-1 3x3 conv (== ConvTranspose2d k3 s1 p1 with pre-flipped taps)
    # as a single im2col matmul: (B*H*W, 9*Cin) x (9*Cin, Cout).
    B, H, W, C = v.shape
    Cout = w_ref.shape[-1]
    _fill_pad(pad_ref, v)
    for kh in range(3):
        for kw in range(3):
            t = kh * 3 + kw
            patch_ref[:, :, :, t * C:(t + 1) * C] = (
                pad_ref[:, kh:kh + H, kw:kw + W, :])
    patch = patch_ref[:, :, :, :9 * C].reshape(B * H * W, 9 * C)
    out = jnp.dot(patch.astype(MXU_DTYPE), w_ref[...],
                  preferred_element_type=jnp.float32)
    return out.reshape(B, H, W, Cout)


def _deconv4x4_s2_phases_from_pad(pad_ref, wp_ref, patch_ref):
    # ConvTranspose2d(k4, s2, p1) via sub-pixel decomposition: output phase
    # (dh, dw) is a stride-1 2x2-window conv on the 1-padded input with taps
    # kh = 3 - dh - 2r, kw = 3 - dw - 2s.  One im2col matmul per phase,
    # contraction depth 4*Cin.  pad_ref must already hold the padded input.
    B = pad_ref.shape[0]
    H = pad_ref.shape[1] - 2
    W = pad_ref.shape[2] - 2
    C = pad_ref.shape[3]
    Cout = wp_ref.shape[-1]
    phases = []
    for dh in range(2):
        for dw in range(2):
            for r in range(2):
                for s in range(2):
                    t = r * 2 + s
                    patch_ref[:, :, :, t * C:(t + 1) * C] = (
                        pad_ref[:, dh + r:dh + r + H, dw + s:dw + s + W, :])
            patch = patch_ref[:, :, :, :4 * C].reshape(B * H * W, 4 * C)
            out = jnp.dot(patch.astype(MXU_DTYPE), wp_ref[dh * 2 + dw],
                          preferred_element_type=jnp.float32)
            phases.append(out.reshape(B, H, W, Cout))
    return phases


# ------------------------------ fused kernels --------------------------------

def _head_kernel(x_ref, lw_ref, lb_ref, wp_ref, o_ref, pad_ref, patch_ref):
    # Linear -> view(B, C0, H0, W0) (realized as NHWC scatter of the linear
    # output, columns pre-permuted) -> block-0 ConvTranspose2d(k4,s2,p1) in
    # phase form -> BatchNorm.  Output: (4, B, H0, W0, C1) phase tensor.
    pad_ref[...] = jnp.zeros(pad_ref.shape, jnp.float32)
    H0 = pad_ref.shape[1] - 2
    W0 = pad_ref.shape[2] - 2
    C0 = pad_ref.shape[3]
    h = jnp.dot(x_ref[...].astype(MXU_DTYPE), lw_ref[...],
                preferred_element_type=jnp.float32) + lb_ref[...]
    # lw columns are pre-permuted to NHWC order: col = (y*W0 + x)*C0 + c
    for yy in range(H0):
        for xx in range(W0):
            s = (yy * W0 + xx) * C0
            pad_ref[:, 1 + yy:2 + yy, 1 + xx:2 + xx, :] = (
                h[:, s:s + C0][:, None, None, :])
    phases = _deconv4x4_s2_phases_from_pad(pad_ref, wp_ref, patch_ref)
    phases = _bn_phases(phases, leaky=False)
    for p in range(4):
        o_ref[p] = phases[p]


def _block_kernel(h_ref, w1_ref, w2_ref, wp_ref, o_ref, pad_ref, patch_ref,
                  *, final_leaky):
    # Fused ResBlockDeConv middle:
    #   LeakyReLU -> conv3x3 -> BN -> LeakyReLU -> conv3x3 -> BN
    #   -> residual add -> LeakyReLU
    # followed by the NEXT stride-2 ConvTranspose2d (phase form) + its BN
    # (+ LeakyReLU when it is the final stand-alone deconv of the decoder).
    pad_ref[...] = jnp.zeros(pad_ref.shape, jnp.float32)
    y = h_ref[...]                          # residual (already BatchNorm'd)
    t = _leaky(y)
    t = _conv3x3(t, w1_ref, pad_ref, patch_ref)
    t = _bn(t, leaky=True)                  # part-1 BN fused with part-2 leaky
    t = _conv3x3(t, w2_ref, pad_ref, patch_ref)
    t = _bn(t, leaky=False)
    h = _leaky(t + y)
    _fill_pad(pad_ref, h)
    phases = _deconv4x4_s2_phases_from_pad(pad_ref, wp_ref, patch_ref)
    phases = _bn_phases(phases, leaky=final_leaky)
    for p in range(4):
        o_ref[p] = phases[p]


def _tail_kernel(h_ref, w_ref, o_ref, pad_ref, patch_ref):
    # Final ConvTranspose2d(k3, s1, p1) -> sigmoid (NHWC).
    pad_ref[...] = jnp.zeros(pad_ref.shape, jnp.float32)
    t = _conv3x3(h_ref[...], w_ref, pad_ref, patch_ref)
    o_ref[...] = jax.nn.sigmoid(t)


# ----------------------------- pallas_call wrappers --------------------------

def _head_call(x, lw, lb, wp, B, H0, W0, C0, C1):
    return pl.pallas_call(
        _head_kernel,
        out_shape=jax.ShapeDtypeStruct((4, B, H0, W0, C1), jnp.float32),
        scratch_shapes=[
            pltpu.VMEM((B, H0 + 2, W0 + 2, C0), jnp.float32),
            pltpu.VMEM((B, H0, W0, 4 * C0), jnp.float32),
        ],
    )(x, lw, lb, wp)


def _block_call(h, w1, w2, wp, final_leaky):
    B, H, W, C = h.shape
    Cn = wp.shape[-1]
    kernel = functools.partial(_block_kernel, final_leaky=final_leaky)
    return pl.pallas_call(
        kernel,
        out_shape=jax.ShapeDtypeStruct((4, B, H, W, Cn), jnp.float32),
        scratch_shapes=[
            pltpu.VMEM((B, H + 2, W + 2, C), jnp.float32),
            pltpu.VMEM((B, H, W, 9 * C), jnp.float32),
        ],
    )(h, w1, w2, wp)


def _tail_call(h, w):
    B, H, W, C = h.shape
    Cout = w.shape[-1]
    return pl.pallas_call(
        _tail_kernel,
        out_shape=jax.ShapeDtypeStruct((B, H, W, Cout), jnp.float32),
        scratch_shapes=[
            pltpu.VMEM((B, H + 2, W + 2, C), jnp.float32),
            pltpu.VMEM((B, H, W, 9 * C), jnp.float32),
        ],
    )(h, w)


# --------------------------- weight pre-processing ---------------------------

def _prep_linear(lin_w, lin_b, C0, H0, W0):
    # torch Linear weight (C0*H0*W0, latent), rows in (c, h, w) order.
    # Permute columns so the matmul output is already NHWC-flattened.
    latent = lin_w.shape[1]
    w = lin_w.reshape(C0, H0, W0, latent)
    w = jnp.transpose(w, (1, 2, 0, 3)).reshape(H0 * W0 * C0, latent)
    w = jnp.transpose(w, (1, 0)).astype(MXU_DTYPE)        # (latent, H0*W0*C0)
    b = lin_b.reshape(C0, H0, W0)
    b = jnp.transpose(b, (1, 2, 0)).reshape(1, H0 * W0 * C0).astype(jnp.float32)
    return w, b


def _prep_conv3(w_t):
    # ConvTranspose2d weight (Cin, Cout, 3, 3) -> im2col conv taps
    # (9*Cin, Cout): Wm[(kh*3+kw)*Cin + ci, co] = W[ci, co, 2-kh, 2-kw].
    Cin, Cout, K, _ = w_t.shape
    wc = jnp.transpose(w_t[:, :, ::-1, ::-1], (2, 3, 0, 1))   # (kh, kw, ci, co)
    return wc.reshape(K * K * Cin, Cout).astype(MXU_DTYPE)


def _prep_deconv4(w_t):
    # ConvTranspose2d weight (Cin, Cout, 4, 4) -> (4, 4*Cin, Cout) per-phase
    # 2x2 sub-kernels (phase order dh*2+dw; window order r, s):
    #   kh = 3 - dh - 2r, kw = 3 - dw - 2s.
    Cin, Cout, _, _ = w_t.shape
    phases = []
    for dh in range(2):
        for dw in range(2):
            taps = []
            for r in range(2):
                for s in range(2):
                    taps.append(w_t[:, :, 3 - dh - 2 * r, 3 - dw - 2 * s])
            phases.append(jnp.concatenate(taps, axis=0))      # (4*Cin, Cout)
    return jnp.stack(phases, axis=0).astype(MXU_DTYPE)


def _interleave_phases(ph):
    # (4, B, H, W, C) phase tensor (order dh*2+dw) -> (B, 2H, 2W, C).
    _, B, H, W, C = ph.shape
    p = ph.reshape(2, 2, B, H, W, C)
    p = jnp.transpose(p, (2, 3, 0, 4, 1, 5))
    return p.reshape(B, 2 * H, 2 * W, C)


# ------------------------------- forward pass --------------------------------

def lbae_decoder_forward(params, x, input_size):
    """x: (B, latent) float32 -> (B, C_out, H_out, W_out) float32 (NCHW)."""
    B = x.shape[0]
    x = x.reshape(B, -1).astype(jnp.float32)
    C0, H0, W0 = input_size
    blocks = params["blocks"]
    nl = len(blocks)

    lw, lb = _prep_linear(params["lin_w"], params["lin_b"], C0, H0, W0)

    # stage 0: linear + block-0 stride-2 deconv + BN  (fused kernel)
    wp0 = _prep_deconv4(blocks[0]["w0"])
    C1 = blocks[0]["w0"].shape[1]
    ph = _head_call(x, lw, lb, wp0, B, H0, W0, C0, C1)
    h = _interleave_phases(ph)

    # stages 1..nl: ResBlock middle + next stride-2 deconv (+BN[, +leaky])
    for i in range(nl):
        w1 = _prep_conv3(blocks[i]["w1"])
        w2 = _prep_conv3(blocks[i]["w2"])
        if i + 1 < nl:
            wp = _prep_deconv4(blocks[i + 1]["w0"])
            final_leaky = False            # next block's initial BN (no act)
        else:
            wp = _prep_deconv4(params["wf0"])
            final_leaky = True             # final deconv: BN + LeakyReLU
        ph = _block_call(h, w1, w2, wp, final_leaky)
        h = _interleave_phases(ph)

    # tail: 3x3 conv to output channels + sigmoid
    wf1 = _prep_conv3(params["wf1"])
    h = _tail_call(h, wf1)
    return jnp.transpose(h, (0, 3, 1, 2))  # NHWC -> NCHW


# --------------------------------- params ------------------------------------

def init_params(key, input_size, output_channels, latent, num_layers):
    C0, H0, W0 = input_size
    keys = iter(jax.random.split(key, 32))

    def rnd(shape):
        return jax.random.normal(next(keys), shape, jnp.float32) * 0.1

    params = {
        "lin_w": rnd((prod(input_size), latent)),   # torch nn.Linear (out, in)
        "lin_b": rnd((prod(input_size),)),
        "blocks": [],
    }
    for i in range(num_layers):
        cin = C0 // (2 ** i)
        ch = C0 // (2 ** (i + 1))
        params["blocks"].append({
            "w0": rnd((cin, ch, 4, 4)),   # initial ConvTranspose2d k4 s2 p1
            "w1": rnd((ch, ch, 3, 3)),    # part 1 ConvTranspose2d k3 s1 p1
            "w2": rnd((ch, ch, 3, 3)),    # part 2 ConvTranspose2d k3 s1 p1
        })
    clast = C0 // (2 ** num_layers)
    params["wf0"] = rnd((clast, clast, 4, 4))
    params["wf1"] = rnd((clast, output_channels, 3, 3))
    return params


# -------------------------- plain-JAX reference ------------------------------

def _ref_deconv(x, w_t, stride):
    _, _, K, _ = w_t.shape
    pad = K - 2
    wc = jnp.transpose(w_t[:, :, ::-1, ::-1], (2, 3, 0, 1))  # HWIO
    return jax.lax.conv_general_dilated(
        x, wc, window_strides=(1, 1),
        padding=((pad, pad), (pad, pad)),
        lhs_dilation=(stride, stride),
        dimension_numbers=("NHWC", "HWIO", "NHWC"),
        precision=jax.lax.Precision.HIGHEST)


def _ref_bn(x, leaky=False):
    mean = jnp.mean(x, axis=(0, 1, 2), keepdims=True)
    var = jnp.mean((x - mean) ** 2, axis=(0, 1, 2), keepdims=True)
    y = (x - mean) / jnp.sqrt(var + BN_EPS)
    if leaky:
        y = jnp.where(y >= 0, y, NEG_SLOPE * y)
    return y


def _ref_leaky(x):
    return jnp.where(x >= 0, x, NEG_SLOPE * x)


def reference_forward(params, x, input_size):
    B = x.shape[0]
    C0, H0, W0 = input_size
    h = jnp.dot(x.reshape(B, -1), jnp.transpose(params["lin_w"]),
                precision=jax.lax.Precision.HIGHEST) + params["lin_b"][None, :]
    h = jnp.transpose(h.reshape(B, C0, H0, W0), (0, 2, 3, 1))
    for blk in params["blocks"]:
        h = _ref_bn(_ref_deconv(h, blk["w0"], 2))
        y = h
        h = _ref_bn(_ref_deconv(_ref_leaky(h), blk["w1"], 1), leaky=True)
        h = _ref_bn(_ref_deconv(h, blk["w2"], 1))
        h = _ref_leaky(h + y)
    h = _ref_bn(_ref_deconv(h, params["wf0"], 2), leaky=True)
    h = jax.nn.sigmoid(_ref_deconv(h, params["wf1"], 1))
    return jnp.transpose(h, (0, 3, 1, 2))


# ---------------------------------- main --------------------------------------

if __name__ == "__main__":
    key = jax.random.PRNGKey(0)
    input_size = (32, 4, 4)       # (C, H, W) fed to the conv stack
    output_size = (3, 32, 32)     # with num_layers=2: 4 -> 8 -> 16 -> 32
    latent_space_size = 32
    num_layers = 2
    batch = 2

    pkey, xkey = jax.random.split(key)
    params = init_params(pkey, input_size, output_size[0],
                         latent_space_size, num_layers)
    x = jax.random.normal(xkey, (batch, latent_space_size), jnp.float32)

    out = lbae_decoder_forward(params, x, input_size)
    out = jax.block_until_ready(out)

    assert out.shape == (batch,) + tuple(output_size), out.shape
    ref = reference_forward(params, x, input_size)
    max_err = float(jnp.max(jnp.abs(out - ref)))
    # Tolerance widened vs. the pure-f32 version because MXU operands are
    # bfloat16 (f32 accumulation); reference is f32 HIGHEST precision.
    if not (bool(jnp.all(jnp.isfinite(out))) and max_err < 5e-2):
        raise AssertionError(f"mismatch vs reference, max abs err = {max_err}")

    print("KERNEL_OK")
</pallas_src>

<mosaic_0001>
module attributes {stable_mosaic.version = 11 : i64} {
  func.func @_head_kernel(%arg0: memref<2x32xf32, #tpu.memory_space<vmem>>, %arg1: memref<32x512xbf16, #tpu.memory_space<vmem>>, %arg2: memref<1x512xf32, #tpu.memory_space<vmem>>, %arg3: memref<4x128x16xbf16, #tpu.memory_space<vmem>>, %arg4: memref<4x2x4x4x16xf32, #tpu.memory_space<vmem>>, %arg5: memref<2x6x6x32xf32, #tpu.memory_space<vmem>>, %arg6: memref<2x4x4x128xf32, #tpu.memory_space<vmem>>) attributes {dimension_semantics = [], scalar_prefetch = 0 : i64, scratch_operands = 2 : i64, tpu.core_type = #tpu.core_type<tc>} {
    %cst = arith.constant 0.000000e+00 : f32
    %0 = vector.broadcast %cst : f32 to vector<2x6x6x32xf32>
    %c0 = arith.constant 0 : index
    %c0_0 = arith.constant 0 : index
    %c0_1 = arith.constant 0 : index
    %c0_2 = arith.constant 0 : index
    %1 = vector.load %arg5[%c0, %c0_0, %c0_1, %c0_2] : memref<2x6x6x32xf32, #tpu.memory_space<vmem>>, vector<2x6x6x32xf32>
    tpu.vector_store %arg5[%c0, %c0_0, %c0_1, %c0_2], %0 {strides = array<i32>} : memref<2x6x6x32xf32, #tpu.memory_space<vmem>>, vector<2x6x6x32xf32>,
    %c0_3 = arith.constant 0 : index
    %c0_4 = arith.constant 0 : index
    %2 = vector.load %arg0[%c0_3, %c0_4] : memref<2x32xf32, #tpu.memory_space<vmem>>, vector<2x32xf32>
    %3 = arith.truncf %2 : vector<2x32xf32> to vector<2x32xbf16>
    %c0_5 = arith.constant 0 : index
    %c0_6 = arith.constant 0 : index
    %4 = vector.load %arg1[%c0_5, %c0_6] : memref<32x512xbf16, #tpu.memory_space<vmem>>, vector<32x512xbf16>
    %cst_7 = arith.constant dense<0.000000e+00> : vector<2x512xf32>
    %5 = tpu.matmul %3, %4, %cst_7 {dimension_numbers = #tpu.dot_dimension_numbers<[1], [0], [0], [1], [0, 0, 1, 1], [], []>} : vector<2x32xbf16>, vector<32x512xbf16>, vector<2x512xf32> -> vector<2x512xf32>
    %c0_8 = arith.constant 0 : index
    %c0_9 = arith.constant 0 : index
    %6 = vector.load %arg2[%c0_8, %c0_9] : memref<1x512xf32, #tpu.memory_space<vmem>>, vector<1x512xf32>
    %7 = vector.broadcast %6 : vector<1x512xf32> to vector<2x512xf32>
    %8 = arith.addf %5, %7 : vector<2x512xf32>
    %9 = vector.extract_strided_slice %8 {offsets = [0, 0], sizes = [2, 32], strides = [1, 1]} : vector<2x512xf32> to vector<2x32xf32>
    %10 = vector.shape_cast %9 : vector<2x32xf32> to vector<2x1x1x32xf32>
    %c0_10 = arith.constant 0 : index
    %c1 = arith.constant 1 : index
    %c1_11 = arith.constant 1 : index
    %c0_12 = arith.constant 0 : index
    %11 = vector.load %arg5[%c0_10, %c1, %c1_11, %c0_12] : memref<2x6x6x32xf32, #tpu.memory_space<vmem>>, vector<2x1x1x32xf32>
    tpu.vector_store %arg5[%c0_10, %c1, %c1_11, %c0_12], %10 {strides = array<i32>} : memref<2x6x6x32xf32, #tpu.memory_space<vmem>>, vector<2x1x1x32xf32>,
    %12 = vector.extract_strided_slice %8 {offsets = [0, 32], sizes = [2, 32], strides = [1, 1]} : vector<2x512xf32> to vector<2x32xf32>
    %13 = vector.shape_cast %12 : vector<2x32xf32> to vector<2x1x1x32xf32>
    %c0_13 = arith.constant 0 : index
    %c1_14 = arith.constant 1 : index
    %c2 = arith.constant 2 : index
    %c0_15 = arith.constant 0 : index
    %14 = vector.load %arg5[%c0_13, %c1_14, %c2, %c0_15] : memref<2x6x6x32xf32, #tpu.memory_space<vmem>>, vector<2x1x1x32xf32>
    tpu.vector_store %arg5[%c0_13, %c1_14, %c2, %c0_15], %13 {strides = array<i32>} : memref<2x6x6x32xf32, #tpu.memory_space<vmem>>, vector<2x1x1x32xf32>,
    %15 = vector.extract_strided_slice %8 {offsets = [0, 64], sizes = [2, 32], strides = [1, 1]} : vector<2x512xf32> to vector<2x32xf32>
    %16 = vector.shape_cast %15 : vector<2x32xf32> to vector<2x1x1x32xf32>
    %c0_16 = arith.constant 0 : index
    %c1_17 = arith.constant 1 : index
    %c3 = arith.constant 3 : index
    %c0_18 = arith.constant 0 : index
    %17 = vector.load %arg5[%c0_16, %c1_17, %c3, %c0_18] : memref<2x6x6x32xf32, #tpu.memory_space<vmem>>, vector<2x1x1x32xf32>
    tpu.vector_store %arg5[%c0_16, %c1_17, %c3, %c0_18], %16 {strides = array<i32>} : memref<2x6x6x32xf32, #tpu.memory_space<vmem>>, vector<2x1x1x32xf32>,
    %18 = vector.extract_strided_slice %8 {offsets = [0, 96], sizes = [2, 32], strides = [1, 1]} : vector<2x512xf32> to vector<2x32xf32>
    %19 = vector.shape_cast %18 : vector<2x32xf32> to vector<2x1x1x32xf32>
    %c0_19 = arith.constant 0 : index
    %c1_20 = arith.constant 1 : index
    %c4 = arith.constant 4 : index
    %c0_21 = arith.constant 0 : index
    %20 = vector.load %arg5[%c0_19, %c1_20, %c4, %c0_21] : memref<2x6x6x32xf32, #tpu.memory_space<vmem>>, vector<2x1x1x32xf32>
    tpu.vector_store %arg5[%c0_19, %c1_20, %c4, %c0_21], %19 {strides = array<i32>} : memref<2x6x6x32xf32, #tpu.memory_space<vmem>>, vector<2x1x1x32xf32>,
    %21 = vector.extract_strided_slice %8 {offsets = [0, 128], sizes = [2, 32], strides = [1, 1]} : vector<2x512xf32> to vector<2x32xf32>
    %22 = vector.shape_cast %21 : vector<2x32xf32> to vector<2x1x1x32xf32>
    %c0_22 = arith.constant 0 : index
    %c2_23 = arith.constant 2 : index
    %c1_24 = arith.constant 1 : index
    %c0_25 = arith.constant 0 : index
    %23 = vector.load %arg5[%c0_22, %c2_23, %c1_24, %c0_25] : memref<2x6x6x32xf32, #tpu.memory_space<vmem>>, vector<2x1x1x32xf32>
    tpu.vector_store %arg5[%c0_22, %c2_23, %c1_24, %c0_25], %22 {strides = array<i32>} : memref<2x6x6x32xf32, #tpu.memory_space<vmem>>, vector<2x1x1x32xf32>,
    %24 = vector.extract_strided_slice %8 {offsets = [0, 160], sizes = [2, 32], strides = [1, 1]} : vector<2x512xf32> to vector<2x32xf32>
    %25 = vector.shape_cast %24 : vector<2x32xf32> to vector<2x1x1x32xf32>
    %c0_26 = arith.constant 0 : index
    %c2_27 = arith.constant 2 : index
    %c2_28 = arith.constant 2 : index
    %c0_29 = arith.constant 0 : index
    %26 = vector.load %arg5[%c0_26, %c2_27, %c2_28, %c0_29] : memref<2x6x6x32xf32, #tpu.memory_space<vmem>>, vector<2x1x1x32xf32>
    tpu.vector_store %arg5[%c0_26, %c2_27, %c2_28, %c0_29], %25 {strides = array<i32>} : memref<2x6x6x32xf32, #tpu.memory_space<vmem>>, vector<2x1x1x32xf32>,
    %27 = vector.extract_strided_slice %8 {offsets = [0, 192], sizes = [2, 32], strides = [1, 1]} : vector<2x512xf32> to vector<2x32xf32>
    %28 = vector.shape_cast %27 : vector<2x32xf32> to vector<2x1x1x32xf32>
    %c0_30 = arith.constant 0 : index
    %c2_31 = arith.constant 2 : index
    %c3_32 = arith.constant 3 : index
    %c0_33 = arith.constant 0 : index
    %29 = vector.load %arg5[%c0_30, %c2_31, %c3_32, %c0_33] : memref<2x6x6x32xf32, #tpu.memory_space<vmem>>, vector<2x1x1x32xf32>
    tpu.vector_store %arg5[%c0_30, %c2_31, %c3_32, %c0_33], %28 {strides = array<i32>} : memref<2x6x6x32xf32, #tpu.memory_space<vmem>>, vector<2x1x1x32xf32>,
    %30 = vector.extract_strided_slice %8 {offsets = [0, 224], sizes = [2, 32], strides = [1, 1]} : vector<2x512xf32> to vector<2x32xf32>
    %31 = vector.shape_cast %30 : vector<2x32xf32> to vector<2x1x1x32xf32>
    %c0_34 = arith.constant 0 : index
    %c2_35 = arith.constant 2 : index
    %c4_36 = arith.constant 4 : index
    %c0_37 = arith.constant 0 : index
    %32 = vector.load %arg5[%c0_34, %c2_35, %c4_36, %c0_37] : memref<2x6x6x32xf32, #tpu.memory_space<vmem>>, vector<2x1x1x32xf32>
    tpu.vector_store %arg5[%c0_34, %c2_35, %c4_36, %c0_37], %31 {strides = array<i32>} : memref<2x6x6x32xf32, #tpu.memory_space<vmem>>, vector<2x1x1x32xf32>,
    %33 = vector.extract_strided_slice %8 {offsets = [0, 256], sizes = [2, 32], strides = [1, 1]} : vector<2x512xf32> to vector<2x32xf32>
    %34 = vector.shape_cast %33 : vector<2x32xf32> to vector<2x1x1x32xf32>
    %c0_38 = arith.constant 0 : index
    %c3_39 = arith.constant 3 : index
    %c1_40 = arith.constant 1 : index
    %c0_41 = arith.constant 0 : index
    %35 = vector.load %arg5[%c0_38, %c3_39, %c1_40, %c0_41] : memref<2x6x6x32xf32, #tpu.memory_space<vmem>>, vector<2x1x1x32xf32>
    tpu.vector_store %arg5[%c0_38, %c3_39, %c1_40, %c0_41], %34 {strides = array<i32>} : memref<2x6x6x32xf32, #tpu.memory_space<vmem>>, vector<2x1x1x32xf32>,
    %36 = vector.extract_strided_slice %8 {offsets = [0, 288], sizes = [2, 32], strides = [1, 1]} : vector<2x512xf32> to vector<2x32xf32>
    %37 = vector.shape_cast %36 : vector<2x32xf32> to vector<2x1x1x32xf32>
    %c0_42 = arith.constant 0 : index
    %c3_43 = arith.constant 3 : index
    %c2_44 = arith.constant 2 : index
    %c0_45 = arith.constant 0 : index
    %38 = vector.load %arg5[%c0_42, %c3_43, %c2_44, %c0_45] : memref<2x6x6x32xf32, #tpu.memory_space<vmem>>, vector<2x1x1x32xf32>
    tpu.vector_store %arg5[%c0_42, %c3_43, %c2_44, %c0_45], %37 {strides = array<i32>} : memref<2x6x6x32xf32, #tpu.memory_space<vmem>>, vector<2x1x1x32xf32>,
    %39 = vector.extract_strided_slice %8 {offsets = [0, 320], sizes = [2, 32], strides = [1, 1]} : vector<2x512xf32> to vector<2x32xf32>
    %40 = vector.shape_cast %39 : vector<2x32xf32> to vector<2x1x1x32xf32>
    %c0_46 = arith.constant 0 : index
    %c3_47 = arith.constant 3 : index
    %c3_48 = arith.constant 3 : index
    %c0_49 = arith.constant 0 : index
    %41 = vector.load %arg5[%c0_46, %c3_47, %c3_48, %c0_49] : memref<2x6x6x32xf32, #tpu.memory_space<vmem>>, vector<2x1x1x32xf32>
    tpu.vector_store %arg5[%c0_46, %c3_47, %c3_48, %c0_49], %40 {strides = array<i32>} : memref<2x6x6x32xf32, #tpu.memory_space<vmem>>, vector<2x1x1x32xf32>,
    %42 = vector.extract_strided_slice %8 {offsets = [0, 352], sizes = [2, 32], strides = [1, 1]} : vector<2x512xf32> to vector<2x32xf32>
    %43 = vector.shape_cast %42 : vector<2x32xf32> to vector<2x1x1x32xf32>
    %c0_50 = arith.constant 0 : index
    %c3_51 = arith.constant 3 : index
    %c4_52 = arith.constant 4 : index
    %c0_53 = arith.constant 0 : index
    %44 = vector.load %arg5[%c0_50, %c3_51, %c4_52, %c0_53] : memref<2x6x6x32xf32, #tpu.memory_space<vmem>>, vector<2x1x1x32xf32>
    tpu.vector_store %arg5[%c0_50, %c3_51, %c4_52, %c0_53], %43 {strides = array<i32>} : memref<2x6x6x32xf32, #tpu.memory_space<vmem>>, vector<2x1x1x32xf32>,
    %45 = vector.extract_strided_slice %8 {offsets = [0, 384], sizes = [2, 32], strides = [1, 1]} : vector<2x512xf32> to vector<2x32xf32>
    %46 = vector.shape_cast %45 : vector<2x32xf32> to vector<2x1x1x32xf32>
    %c0_54 = arith.constant 0 : index
    %c4_55 = arith.constant 4 : index
    %c1_56 = arith.constant 1 : index
    %c0_57 = arith.constant 0 : index
    %47 = vector.load %arg5[%c0_54, %c4_55, %c1_56, %c0_57] : memref<2x6x6x32xf32, #tpu.memory_space<vmem>>, vector<2x1x1x32xf32>
    tpu.vector_store %arg5[%c0_54, %c4_55, %c1_56, %c0_57], %46 {strides = array<i32>} : memref<2x6x6x32xf32, #tpu.memory_space<vmem>>, vector<2x1x1x32xf32>,
    %48 = vector.extract_strided_slice %8 {offsets = [0, 416], sizes = [2, 32], strides = [1, 1]} : vector<2x512xf32> to vector<2x32xf32>
    %49 = vector.shape_cast %48 : vector<2x32xf32> to vector<2x1x1x32xf32>
    %c0_58 = arith.constant 0 : index
    %c4_59 = arith.constant 4 : index
    %c2_60 = arith.constant 2 : index
    %c0_61 = arith.constant 0 : index
    %50 = vector.load %arg5[%c0_58, %c4_59, %c2_60, %c0_61] : memref<2x6x6x32xf32, #tpu.memory_space<vmem>>, vector<2x1x1x32xf32>
    tpu.vector_store %arg5[%c0_58, %c4_59, %c2_60, %c0_61], %49 {strides = array<i32>} : memref<2x6x6x32xf32, #tpu.memory_space<vmem>>, vector<2x1x1x32xf32>,
    %51 = vector.extract_strided_slice %8 {offsets = [0, 448], sizes = [2, 32], strides = [1, 1]} : vector<2x512xf32> to vector<2x32xf32>
    %52 = vector.shape_cast %51 : vector<2x32xf32> to vector<2x1x1x32xf32>
    %c0_62 = arith.constant 0 : index
    %c4_63 = arith.constant 4 : index
    %c3_64 = arith.constant 3 : index
    %c0_65 = arith.constant 0 : index
    %53 = vector.load %arg5[%c0_62, %c4_63, %c3_64, %c0_65] : memref<2x6x6x32xf32, #tpu.memory_space<vmem>>, vector<2x1x1x32xf32>
    tpu.vector_store %arg5[%c0_62, %c4_63, %c3_64, %c0_65], %52 {strides = array<i32>} : memref<2x6x6x32xf32, #tpu.memory_space<vmem>>, vector<2x1x1x32xf32>,
    %54 = vector.extract_strided_slice %8 {offsets = [0, 480], sizes = [2, 32], strides = [1, 1]} : vector<2x512xf32> to vector<2x32xf32>
    %55 = vector.shape_cast %54 : vector<2x32xf32> to vector<2x1x1x32xf32>
    %c0_66 = arith.constant 0 : index
    %c4_67 = arith.constant 4 : index
    %c4_68 = arith.constant 4 : index
    %c0_69 = arith.constant 0 : index
    %56 = vector.load %arg5[%c0_66, %c4_67, %c4_68, %c0_69] : memref<2x6x6x32xf32, #tpu.memory_space<vmem>>, vector<2x1x1x32xf32>
    tpu.vector_store %arg5[%c0_66, %c4_67, %c4_68, %c0_69], %55 {strides = array<i32>} : memref<2x6x6x32xf32, #tpu.memory_space<vmem>>, vector<2x1x1x32xf32>,
    %c0_70 = arith.constant 0 : index
    %c0_71 = arith.constant 0 : index
    %c0_72 = arith.constant 0 : index
    %c0_73 = arith.constant 0 : index
    %57 = vector.load %arg5[%c0_70, %c0_71, %c0_72, %c0_73] : memref<2x6x6x32xf32, #tpu.memory_space<vmem>>, vector<2x4x4x32xf32>
    %c0_74 = arith.constant 0 : index
    %c0_75 = arith.constant 0 : index
    %c0_76 = arith.constant 0 : index
    %c0_77 = arith.constant 0 : index
    %58 = vector.load %arg6[%c0_74, %c0_75, %c0_76, %c0_77] : memref<2x4x4x128xf32, #tpu.memory_space<vmem>>, vector<2x4x4x32xf32>
    tpu.vector_store %arg6[%c0_74, %c0_75, %c0_76, %c0_77], %57 {strides = array<i32>} : memref<2x4x4x128xf32, #tpu.memory_space<vmem>>, vector<2x4x4x32xf32>,
    %c0_78 = arith.constant 0 : index
    %c0_79 = arith.constant 0 : index
    %c1_80 = arith.constant 1 : index
    %c0_81 = arith.constant 0 : index
    %59 = vector.load %arg5[%c0_78, %c0_79, %c1_80, %c0_81] : memref<2x6x6x32xf32, #tpu.memory_space<vmem>>, vector<2x4x4x32xf32>
    %c0_82 = arith.constant 0 : index
    %c0_83 = arith.constant 0 : index
    %c0_84 = arith.constant 0 : index
    %c32 = arith.constant 32 : index
    %60 = vector.load %arg6[%c0_82, %c0_83, %c0_84, %c32] : memref<2x4x4x128xf32, #tpu.memory_space<vmem>>, vector<2x4x4x32xf32>
    tpu.vector_store %arg6[%c0_82, %c0_83, %c0_84, %c32], %59 {strides = array<i32>} : memref<2x4x4x128xf32, #tpu.memory_space<vmem>>, vector<2x4x4x32xf32>,
    %c0_85 = arith.constant 0 : index
    %c1_86 = arith.constant 1 : index
    %c0_87 = arith.constant 0 : index
    %c0_88 = arith.constant 0 : index
    %61 = vector.load %arg5[%c0_85, %c1_86, %c0_87, %c0_88] : memref<2x6x6x32xf32, #tpu.memory_space<vmem>>, vector<2x4x4x32xf32>
    %c0_89 = arith.constant 0 : index
    %c0_90 = arith.constant 0 : index
    %c0_91 = arith.constant 0 : index
    %c64 = arith.constant 64 : index
    %62 = vector.load %arg6[%c0_89, %c0_90, %c0_91, %c64] : memref<2x4x4x128xf32, #tpu.memory_space<vmem>>, vector<2x4x4x32xf32>
    tpu.vector_store %arg6[%c0_89, %c0_90, %c0_91, %c64], %61 {strides = array<i32>} : memref<2x4x4x128xf32, #tpu.memory_space<vmem>>, vector<2x4x4x32xf32>,
    %c0_92 = arith.constant 0 : index
    %c1_93 = arith.constant 1 : index
    %c1_94 = arith.constant 1 : index
    %c0_95 = arith.constant 0 : index
    %63 = vector.load %arg5[%c0_92, %c1_93, %c1_94, %c0_95] : memref<2x6x6x32xf32, #tpu.memory_space<vmem>>, vector<2x4x4x32xf32>
    %c0_96 = arith.constant 0 : index
    %c0_97 = arith.constant 0 : index
    %c0_98 = arith.constant 0 : index
    %c96 = arith.constant 96 : index
    %64 = vector.load %arg6[%c0_96, %c0_97, %c0_98, %c96] : memref<2x4x4x128xf32, #tpu.memory_space<vmem>>, vector<2x4x4x32xf32>
    tpu.vector_store %arg6[%c0_96, %c0_97, %c0_98, %c96], %63 {strides = array<i32>} : memref<2x4x4x128xf32, #tpu.memory_space<vmem>>, vector<2x4x4x32xf32>,
    %c0_99 = arith.constant 0 : index
    %c0_100 = arith.constant 0 : index
    %c0_101 = arith.constant 0 : index
    %c0_102 = arith.constant 0 : index
    %65 = vector.load %arg6[%c0_99, %c0_100, %c0_101, %c0_102] : memref<2x4x4x128xf32, #tpu.memory_space<vmem>>, vector<2x4x4x128xf32>
    %66 = vector.shape_cast %65 : vector<2x4x4x128xf32> to vector<32x128xf32>
    %67 = arith.truncf %66 : vector<32x128xf32> to vector<32x128xbf16>
    %c0_103 = arith.constant 0 : index
    %c0_104 = arith.constant 0 : index
    %c0_105 = arith.constant 0 : index
    %68 = vector.load %arg3[%c0_103, %c0_104, %c0_105] : memref<4x128x16xbf16, #tpu.memory_space<vmem>>, vector<1x128x16xbf16>
    %69 = vector.shape_cast %68 : vector<1x128x16xbf16> to vector<128x16xbf16>
    %cst_106 = arith.constant dense<0.000000e+00> : vector<32x16xf32>
    %70 = tpu.matmul %67, %69, %cst_106 {dimension_numbers = #tpu.dot_dimension_numbers<[1], [0], [0], [1], [0, 0, 1, 1], [], []>} : vector<32x128xbf16>, vector<128x16xbf16>, vector<32x16xf32> -> vector<32x16xf32>
    %71 = vector.shape_cast %70 : vector<32x16xf32> to vector<2x4x4x16xf32>
    %c0_107 = arith.constant 0 : index
    %c0_108 = arith.constant 0 : index
    %c1_109 = arith.constant 1 : index
    %c0_110 = arith.constant 0 : index
    %72 = vector.load %arg5[%c0_107, %c0_108, %c1_109, %c0_110] : memref<2x6x6x32xf32, #tpu.memory_space<vmem>>, vector<2x4x4x32xf32>
    %c0_111 = arith.constant 0 : index
    %c0_112 = arith.constant 0 : index
    %c0_113 = arith.constant 0 : index
    %c0_114 = arith.constant 0 : index
    %73 = vector.load %arg6[%c0_111, %c0_112, %c0_113, %c0_114] : memref<2x4x4x128xf32, #tpu.memory_space<vmem>>, vector<2x4x4x32xf32>
    tpu.vector_store %arg6[%c0_111, %c0_112, %c0_113, %c0_114], %72 {strides = array<i32>} : memref<2x4x4x128xf32, #tpu.memory_space<vmem>>, vector<2x4x4x32xf32>,
    %c0_115 = arith.constant 0 : index
    %c0_116 = arith.constant 0 : index
    %c2_117 = arith.constant 2 : index
    %c0_118 = arith.constant 0 : index
    %74 = vector.load %arg5[%c0_115, %c0_116, %c2_117, %c0_118] : memref<2x6x6x32xf32, #tpu.memory_space<vmem>>, vector<2x4x4x32xf32>
    %c0_119 = arith.constant 0 : index
    %c0_120 = arith.constant 0 : index
    %c0_121 = arith.constant 0 : index
    %c32_122 = arith.constant 32 : index
    %75 = vector.load %arg6[%c0_119, %c0_120, %c0_121, %c32_122] : memref<2x4x4x128xf32, #tpu.memory_space<vmem>>, vector<2x4x4x32xf32>
    tpu.vector_store %arg6[%c0_119, %c0_120, %c0_121, %c32_122], %74 {strides = array<i32>} : memref<2x4x4x128xf32, #tpu.memory_space<vmem>>, vector<2x4x4x32xf32>,
    %c0_123 = arith.constant 0 : index
    %c1_124 = arith.constant 1 : index
    %c1_125 = arith.constant 1 : index
    %c0_126 = arith.constant 0 : index
    %76 = vector.load %arg5[%c0_123, %c1_124, %c1_125, %c0_126] : memref<2x6x6x32xf32, #tpu.memory_space<vmem>>, vector<2x4x4x32xf32>
    %c0_127 = arith.constant 0 : index
    %c0_128 = arith.constant 0 : index
    %c0_129 = arith.constant 0 : index
    %c64_130 = arith.constant 64 : index
    %77 = vector.load %arg6[%c0_127, %c0_128, %c0_129, %c64_130] : memref<2x4x4x128xf32, #tpu.memory_space<vmem>>, vector<2x4x4x32xf32>
    tpu.vector_store %arg6[%c0_127, %c0_128, %c0_129, %c64_130], %76 {strides = array<i32>} : memref<2x4x4x128xf32, #tpu.memory_space<vmem>>, vector<2x4x4x32xf32>,
    %c0_131 = arith.constant 0 : index
    %c1_132 = arith.constant 1 : index
    %c2_133 = arith.constant 2 : index
    %c0_134 = arith.constant 0 : index
    %78 = vector.load %arg5[%c0_131, %c1_132, %c2_133, %c0_134] : memref<2x6x6x32xf32, #tpu.memory_space<vmem>>, vector<2x4x4x32xf32>
    %c0_135 = arith.constant 0 : index
    %c0_136 = arith.constant 0 : index
    %c0_137 = arith.constant 0 : index
    %c96_138 = arith.constant 96 : index
    %79 = vector.load %arg6[%c0_135, %c0_136, %c0_137, %c96_138] : memref<2x4x4x128xf32, #tpu.memory_space<vmem>>, vector<2x4x4x32xf32>
    tpu.vector_store %arg6[%c0_135, %c0_136, %c0_137, %c96_138], %78 {strides = array<i32>} : memref<2x4x4x128xf32, #tpu.memory_space<vmem>>, vector<2x4x4x32xf32>,
    %c0_139 = arith.constant 0 : index
    %c0_140 = arith.constant 0 : index
    %c0_141 = arith.constant 0 : index
    %c0_142 = arith.constant 0 : index
    %80 = vector.load %arg6[%c0_139, %c0_140, %c0_141, %c0_142] : memref<2x4x4x128xf32, #tpu.memory_space<vmem>>, vector<2x4x4x128xf32>
    %81 = vector.shape_cast %80 : vector<2x4x4x128xf32> to vector<32x128xf32>
    %82 = arith.truncf %81 : vector<32x128xf32> to vector<32x128xbf16>
    %c1_143 = arith.constant 1 : index
    %c0_144 = arith.constant 0 : index
    %c0_145 = arith.constant 0 : index
    %83 = vector.load %arg3[%c1_143, %c0_144, %c0_145] : memref<4x128x16xbf16, #tpu.memory_space<vmem>>, vector<1x128x16xbf16>
    %84 = vector.shape_cast %83 : vector<1x128x16xbf16> to vector<128x16xbf16>
    %cst_146 = arith.constant dense<0.000000e+00> : vector<32x16xf32>
    %85 = tpu.matmul %82, %84, %cst_146 {dimension_numbers = #tpu.dot_dimension_numbers<[1], [0], [0], [1], [0, 0, 1, 1], [], []>} : vector<32x128xbf16>, vector<128x16xbf16>, vector<32x16xf32> -> vector<32x16xf32>
    %86 = vector.shape_cast %85 : vector<32x16xf32> to vector<2x4x4x16xf32>
    %c0_147 = arith.constant 0 : index
    %c1_148 = arith.constant 1 : index
    %c0_149 = arith.constant 0 : index
    %c0_150 = arith.constant 0 : index
    %87 = vector.load %arg5[%c0_147, %c1_148, %c0_149, %c0_150] : memref<2x6x6x32xf32, #tpu.memory_space<vmem>>, vector<2x4x4x32xf32>
    %c0_151 = arith.constant 0 : index
    %c0_152 = arith.constant 0 : index
    %c0_153 = arith.constant 0 : index
    %c0_154 = arith.constant 0 : index
    %88 = vector.load %arg6[%c0_151, %c0_152, %c0_153, %c0_154] : memref<2x4x4x128xf32, #tpu.memory_space<vmem>>, vector<2x4x4x32xf32>
    tpu.vector_store %arg6[%c0_151, %c0_152, %c0_153, %c0_154], %87 {strides = array<i32>} : memref<2x4x4x128xf32, #tpu.memory_space<vmem>>, vector<2x4x4x32xf32>,
    %c0_155 = arith.constant 0 : index
    %c1_156 = arith.constant 1 : index
    %c1_157 = arith.constant 1 : index
    %c0_158 = arith.constant 0 : index
    %89 = vector.load %arg5[%c0_155, %c1_156, %c1_157, %c0_158] : memref<2x6x6x32xf32, #tpu.memory_space<vmem>>, vector<2x4x4x32xf32>
    %c0_159 = arith.constant 0 : index
    %c0_160 = arith.constant 0 : index
    %c0_161 = arith.constant 0 : index
    %c32_162 = arith.constant 32 : index
    %90 = vector.load %arg6[%c0_159, %c0_160, %c0_161, %c32_162] : memref<2x4x4x128xf32, #tpu.memory_space<vmem>>, vector<2x4x4x32xf32>
    tpu.vector_store %arg6[%c0_159, %c0_160, %c0_161, %c32_162], %89 {strides = array<i32>} : memref<2x4x4x128xf32, #tpu.memory_space<vmem>>, vector<2x4x4x32xf32>,
    %c0_163 = arith.constant 0 : index
    %c2_164 = arith.constant 2 : index
    %c0_165 = arith.constant 0 : index
    %c0_166 = arith.constant 0 : index
    %91 = vector.load %arg5[%c0_163, %c2_164, %c0_165, %c0_166] : memref<2x6x6x32xf32, #tpu.memory_space<vmem>>, vector<2x4x4x32xf32>
    %c0_167 = arith.constant 0 : index
    %c0_168 = arith.constant 0 : index
    %c0_169 = arith.constant 0 : index
    %c64_170 = arith.constant 64 : index
    %92 = vector.load %arg6[%c0_167, %c0_168, %c0_169, %c64_170] : memref<2x4x4x128xf32, #tpu.memory_space<vmem>>, vector<2x4x4x32xf32>
    tpu.vector_store %arg6[%c0_167, %c0_168, %c0_169, %c64_170], %91 {strides = array<i32>} : memref<2x4x4x128xf32, #tpu.memory_space<vmem>>, vector<2x4x4x32xf32>,
    %c0_171 = arith.constant 0 : index
    %c2_172 = arith.constant 2 : index
    %c1_173 = arith.constant 1 : index
    %c0_174 = arith.constant 0 : index
    %93 = vector.load %arg5[%c0_171, %c2_172, %c1_173, %c0_174] : memref<2x6x6x32xf32, #tpu.memory_space<vmem>>, vector<2x4x4x32xf32>
    %c0_175 = arith.constant 0 : index
    %c0_176 = arith.constant 0 : index
    %c0_177 = arith.constant 0 : index
    %c96_178 = arith.constant 96 : index
    %94 = vector.load %arg6[%c0_175, %c0_176, %c0_177, %c96_178] : memref<2x4x4x128xf32, #tpu.memory_space<vmem>>, vector<2x4x4x32xf32>
    tpu.vector_store %arg6[%c0_175, %c0_176, %c0_177, %c96_178], %93 {strides = array<i32>} : memref<2x4x4x128xf32, #tpu.memory_space<vmem>>, vector<2x4x4x32xf32>,
    %c0_179 = arith.constant 0 : index
    %c0_180 = arith.constant 0 : index
    %c0_181 = arith.constant 0 : index
    %c0_182 = arith.constant 0 : index
    %95 = vector.load %arg6[%c0_179, %c0_180, %c0_181, %c0_182] : memref<2x4x4x128xf32, #tpu.memory_space<vmem>>, vector<2x4x4x128xf32>
    %96 = vector.shape_cast %95 : vector<2x4x4x128xf32> to vector<32x128xf32>
    %97 = arith.truncf %96 : vector<32x128xf32> to vector<32x128xbf16>
    %c2_183 = arith.constant 2 : index
    %c0_184 = arith.constant 0 : index
    %c0_185 = arith.constant 0 : index
    %98 = vector.load %arg3[%c2_183, %c0_184, %c0_185] : memref<4x128x16xbf16, #tpu.memory_space<vmem>>, vector<1x128x16xbf16>
    %99 = vector.shape_cast %98 : vector<1x128x16xbf16> to vector<128x16xbf16>
    %cst_186 = arith.constant dense<0.000000e+00> : vector<32x16xf32>
    %100 = tpu.matmul %97, %99, %cst_186 {dimension_numbers = #tpu.dot_dimension_numbers<[1], [0], [0], [1], [0, 0, 1, 1], [], []>} : vector<32x128xbf16>, vector<128x16xbf16>, vector<32x16xf32> -> vector<32x16xf32>
    %101 = vector.shape_cast %100 : vector<32x16xf32> to vector<2x4x4x16xf32>
    %c0_187 = arith.constant 0 : index
    %c1_188 = arith.constant 1 : index
    %c1_189 = arith.constant 1 : index
    %c0_190 = arith.constant 0 : index
    %102 = vector.load %arg5[%c0_187, %c1_188, %c1_189, %c0_190] : memref<2x6x6x32xf32, #tpu.memory_space<vmem>>, vector<2x4x4x32xf32>
    %c0_191 = arith.constant 0 : index
    %c0_192 = arith.constant 0 : index
    %c0_193 = arith.constant 0 : index
    %c0_194 = arith.constant 0 : index
    %103 = vector.load %arg6[%c0_191, %c0_192, %c0_193, %c0_194] : memref<2x4x4x128xf32, #tpu.memory_space<vmem>>, vector<2x4x4x32xf32>
    tpu.vector_store %arg6[%c0_191, %c0_192, %c0_193, %c0_194], %102 {strides = array<i32>} : memref<2x4x4x128xf32, #tpu.memory_space<vmem>>, vector<2x4x4x32xf32>,
    %c0_195 = arith.constant 0 : index
    %c1_196 = arith.constant 1 : index
    %c2_197 = arith.constant 2 : index
    %c0_198 = arith.constant 0 : index
    %104 = vector.load %arg5[%c0_195, %c1_196, %c2_197, %c0_198] : memref<2x6x6x32xf32, #tpu.memory_space<vmem>>, vector<2x4x4x32xf32>
    %c0_199 = arith.constant 0 : index
    %c0_200 = arith.constant 0 : index
    %c0_201 = arith.constant 0 : index
    %c32_202 = arith.constant 32 : index
    %105 = vector.load %arg6[%c0_199, %c0_200, %c0_201, %c32_202] : memref<2x4x4x128xf32, #tpu.memory_space<vmem>>, vector<2x4x4x32xf32>
    tpu.vector_store %arg6[%c0_199, %c0_200, %c0_201, %c32_202], %104 {strides = array<i32>} : memref<2x4x4x128xf32, #tpu.memory_space<vmem>>, vector<2x4x4x32xf32>,
    %c0_203 = arith.constant 0 : index
    %c2_204 = arith.constant 2 : index
    %c1_205 = arith.constant 1 : index
    %c0_206 = arith.constant 0 : index
    %106 = vector.load %arg5[%c0_203, %c2_204, %c1_205, %c0_206] : memref<2x6x6x32xf32, #tpu.memory_space<vmem>>, vector<2x4x4x32xf32>
    %c0_207 = arith.constant 0 : index
    %c0_208 = arith.constant 0 : index
    %c0_209 = arith.constant 0 : index
    %c64_210 = arith.constant 64 : index
    %107 = vector.load %arg6[%c0_207, %c0_208, %c0_209, %c64_210] : memref<2x4x4x128xf32, #tpu.memory_space<vmem>>, vector<2x4x4x32xf32>
    tpu.vector_store %arg6[%c0_207, %c0_208, %c0_209, %c64_210], %106 {strides = array<i32>} : memref<2x4x4x128xf32, #tpu.memory_space<vmem>>, vector<2x4x4x32xf32>,
    %c0_211 = arith.constant 0 : index
    %c2_212 = arith.constant 2 : index
    %c2_213 = arith.constant 2 : index
    %c0_214 = arith.constant 0 : index
    %108 = vector.load %arg5[%c0_211, %c2_212, %c2_213, %c0_214] : memref<2x6x6x32xf32, #tpu.memory_space<vmem>>, vector<2x4x4x32xf32>
    %c0_215 = arith.constant 0 : index
    %c0_216 = arith.constant 0 : index
    %c0_217 = arith.constant 0 : index
    %c96_218 = arith.constant 96 : index
    %109 = vector.load %arg6[%c0_215, %c0_216, %c0_217, %c96_218] : memref<2x4x4x128xf32, #tpu.memory_space<vmem>>, vector<2x4x4x32xf32>
    tpu.vector_store %arg6[%c0_215, %c0_216, %c0_217, %c96_218], %108 {strides = array<i32>} : memref<2x4x4x128xf32, #tpu.memory_space<vmem>>, vector<2x4x4x32xf32>,
    %c0_219 = arith.constant 0 : index
    %c0_220 = arith.constant 0 : index
    %c0_221 = arith.constant 0 : index
    %c0_222 = arith.constant 0 : index
    %110 = vector.load %arg6[%c0_219, %c0_220, %c0_221, %c0_222] : memref<2x4x4x128xf32, #tpu.memory_space<vmem>>, vector<2x4x4x128xf32>
    %111 = vector.shape_cast %110 : vector<2x4x4x128xf32> to vector<32x128xf32>
    %112 = arith.truncf %111 : vector<32x128xf32> to vector<32x128xbf16>
    %c3_223 = arith.constant 3 : index
    %c0_224 = arith.constant 0 : index
    %c0_225 = arith.constant 0 : index
    %113 = vector.load %arg3[%c3_223, %c0_224, %c0_225] : memref<4x128x16xbf16, #tpu.memory_space<vmem>>, vector<1x128x16xbf16>
    %114 = vector.shape_cast %113 : vector<1x128x16xbf16> to vector<128x16xbf16>
    %cst_226 = arith.constant dense<0.000000e+00> : vector<32x16xf32>
    %115 = tpu.matmul %112, %114, %cst_226 {dimension_numbers = #tpu.dot_dimension_numbers<[1], [0], [0], [1], [0, 0, 1, 1], [], []>} : vector<32x128xbf16>, vector<128x16xbf16>, vector<32x16xf32> -> vector<32x16xf32>
    %116 = vector.shape_cast %115 : vector<32x16xf32> to vector<2x4x4x16xf32>
    %cst_227 = arith.constant dense<0.000000e+00> : vector<16xf32>
    %117 = vector.multi_reduction <add>, %71, %cst_227 [0, 1, 2] : vector<2x4x4x16xf32> to vector<16xf32>
    %118 = vector.shape_cast %117 : vector<16xf32> to vector<1x1x1x16xf32>
    %119 = arith.mulf %71, %71 : vector<2x4x4x16xf32>
    %cst_228 = arith.constant dense<0.000000e+00> : vector<16xf32>
    %120 = vector.multi_reduction <add>, %119, %cst_228 [0, 1, 2] : vector<2x4x4x16xf32> to vector<16xf32>
    %121 = vector.shape_cast %120 : vector<16xf32> to vector<1x1x1x16xf32>
    %cst_229 = arith.constant dense<0.000000e+00> : vector<16xf32>
    %122 = vector.multi_reduction <add>, %86, %cst_229 [0, 1, 2] : vector<2x4x4x16xf32> to vector<16xf32>
    %123 = vector.shape_cast %122 : vector<16xf32> to vector<1x1x1x16xf32>
    %124 = arith.mulf %86, %86 : vector<2x4x4x16xf32>
    %cst_230 = arith.constant dense<0.000000e+00> : vector<16xf32>
    %125 = vector.multi_reduction <add>, %124, %cst_230 [0, 1, 2] : vector<2x4x4x16xf32> to vector<16xf32>
    %126 = vector.shape_cast %125 : vector<16xf32> to vector<1x1x1x16xf32>
    %127 = arith.addf %118, %123 : vector<1x1x1x16xf32>
    %128 = arith.addf %121, %126 : vector<1x1x1x16xf32>
    %cst_231 = arith.constant dense<0.000000e+00> : vector<16xf32>
    %129 = vector.multi_reduction <add>, %101, %cst_231 [0, 1, 2] : vector<2x4x4x16xf32> to vector<16xf32>
    %130 = vector.shape_cast %129 : vector<16xf32> to vector<1x1x1x16xf32>
    %131 = arith.mulf %101, %101 : vector<2x4x4x16xf32>
    %cst_232 = arith.constant dense<0.000000e+00> : vector<16xf32>
    %132 = vector.multi_reduction <add>, %131, %cst_232 [0, 1, 2] : vector<2x4x4x16xf32> to vector<16xf32>
    %133 = vector.shape_cast %132 : vector<16xf32> to vector<1x1x1x16xf32>
    %134 = arith.addf %127, %130 : vector<1x1x1x16xf32>
    %135 = arith.addf %128, %133 : vector<1x1x1x16xf32>
    %cst_233 = arith.constant dense<0.000000e+00> : vector<16xf32>
    %136 = vector.multi_reduction <add>, %116, %cst_233 [0, 1, 2] : vector<2x4x4x16xf32> to vector<16xf32>
    %137 = vector.shape_cast %136 : vector<16xf32> to vector<1x1x1x16xf32>
    %138 = arith.mulf %116, %116 : vector<2x4x4x16xf32>
    %cst_234 = arith.constant dense<0.000000e+00> : vector<16xf32>
    %139 = vector.multi_reduction <add>, %138, %cst_234 [0, 1, 2] : vector<2x4x4x16xf32> to vector<16xf32>
    %140 = vector.shape_cast %139 : vector<16xf32> to vector<1x1x1x16xf32>
    %141 = arith.addf %134, %137 : vector<1x1x1x16xf32>
    %142 = arith.addf %135, %140 : vector<1x1x1x16xf32>
    %cst_235 = arith.constant 1.280000e+02 : f32
    %143 = vector.broadcast %cst_235 : f32 to vector<1x1x1x16xf32>
    %144 = arith.divf %141, %143 : vector<1x1x1x16xf32>
    %cst_236 = arith.constant 1.280000e+02 : f32
    %145 = vector.broadcast %cst_236 : f32 to vector<1x1x1x16xf32>
    %146 = arith.divf %142, %145 : vector<1x1x1x16xf32>
    %147 = arith.mulf %144, %144 : vector<1x1x1x16xf32>
    %148 = arith.subf %146, %147 : vector<1x1x1x16xf32>
    %cst_237 = arith.constant 9.99999974E-6 : f32
    %149 = vector.broadcast %cst_237 : f32 to vector<1x1x1x16xf32>
    %150 = arith.addf %148, %149 : vector<1x1x1x16xf32>
    %151 = math.rsqrt %150 : vector<1x1x1x16xf32>
    %152 = vector.broadcast %144 : vector<1x1x1x16xf32> to vector<2x4x4x16xf32>
    %153 = arith.subf %71, %152 : vector<2x4x4x16xf32>
    %154 = vector.broadcast %151 : vector<1x1x1x16xf32> to vector<2x4x4x16xf32>
    %155 = arith.mulf %153, %154 : vector<2x4x4x16xf32>
    %156 = vector.broadcast %144 : vector<1x1x1x16xf32> to vector<2x4x4x16xf32>
    %157 = arith.subf %86, %156 : vector<2x4x4x16xf32>
    %158 = vector.broadcast %151 : vector<1x1x1x16xf32> to vector<2x4x4x16xf32>
    %159 = arith.mulf %157, %158 : vector<2x4x4x16xf32>
    %160 = vector.broadcast %144 : vector<1x1x1x16xf32> to vector<2x4x4x16xf32>
    %161 = arith.subf %101, %160 : vector<2x4x4x16xf32>
    %162 = vector.broadcast %151 : vector<1x1x1x16xf32> to vector<2x4x4x16xf32>
    %163 = arith.mulf %161, %162 : vector<2x4x4x16xf32>
    %164 = vector.broadcast %144 : vector<1x1x1x16xf32> to vector<2x4x4x16xf32>
    %165 = arith.subf %116, %164 : vector<2x4x4x16xf32>
    %166 = vector.broadcast %151 : vector<1x1x1x16xf32> to vector<2x4x4x16xf32>
    %167 = arith.mulf %165, %166 : vector<2x4x4x16xf32>
    %c0_238 = arith.constant 0 : index
    %c0_239 = arith.constant 0 : index
    %c0_240 = arith.constant 0 : index
    %c0_241 = arith.constant 0 : index
    %c0_242 = arith.constant 0 : index
    %168 = vector.load %arg4[%c0_238, %c0_239, %c0_240, %c0_241, %c0_242] : memref<4x2x4x4x16xf32, #tpu.memory_space<vmem>>, vector<1x2x4x4x16xf32>
    %169 = vector.shape_cast %168 : vector<1x2x4x4x16xf32> to vector<2x4x4x16xf32>
    %170 = vector.shape_cast %155 : vector<2x4x4x16xf32> to vector<1x2x4x4x16xf32>
    tpu.vector_store %arg4[%c0_238, %c0_239, %c0_240, %c0_241, %c0_242], %170 {strides = array<i32>} : memref<4x2x4x4x16xf32, #tpu.memory_space<vmem>>, vector<1x2x4x4x16xf32>,
    %c1_243 = arith.constant 1 : index
    %c0_244 = arith.constant 0 : index
    %c0_245 = arith.constant 0 : index
    %c0_246 = arith.constant 0 : index
    %c0_247 = arith.constant 0 : index
    %171 = vector.load %arg4[%c1_243, %c0_244, %c0_245, %c0_246, %c0_247] : memref<4x2x4x4x16xf32, #tpu.memory_space<vmem>>, vector<1x2x4x4x16xf32>
    %172 = vector.shape_cast %171 : vector<1x2x4x4x16xf32> to vector<2x4x4x16xf32>
    %173 = vector.shape_cast %159 : vector<2x4x4x16xf32> to vector<1x2x4x4x16xf32>
    tpu.vector_store %arg4[%c1_243, %c0_244, %c0_245, %c0_246, %c0_247], %173 {strides = array<i32>} : memref<4x2x4x4x16xf32, #tpu.memory_space<vmem>>, vector<1x2x4x4x16xf32>,
    %c2_248 = arith.constant 2 : index
    %c0_249 = arith.constant 0 : index
    %c0_250 = arith.constant 0 : index
    %c0_251 = arith.constant 0 : index
    %c0_252 = arith.constant 0 : index
    %174 = vector.load %arg4[%c2_248, %c0_249, %c0_250, %c0_251, %c0_252] : memref<4x2x4x4x16xf32, #tpu.memory_space<vmem>>, vector<1x2x4x4x16xf32>
    %175 = vector.shape_cast %174 : vector<1x2x4x4x16xf32> to vector<2x4x4x16xf32>
    %176 = vector.shape_cast %163 : vector<2x4x4x16xf32> to vector<1x2x4x4x16xf32>
    tpu.vector_store %arg4[%c2_248, %c0_249, %c0_250, %c0_251, %c0_252], %176 {strides = array<i32>} : memref<4x2x4x4x16xf32, #tpu.memory_space<vmem>>, vector<1x2x4x4x16xf32>,
    %c3_253 = arith.constant 3 : index
    %c0_254 = arith.constant 0 : index
    %c0_255 = arith.constant 0 : index
    %c0_256 = arith.constant 0 : index
    %c0_257 = arith.constant 0 : index
    %177 = vector.load %arg4[%c3_253, %c0_254, %c0_255, %c0_256, %c0_257] : memref<4x2x4x4x16xf32, #tpu.memory_space<vmem>>, vector<1x2x4x4x16xf32>
    %178 = vector.shape_cast %177 : vector<1x2x4x4x16xf32> to vector<2x4x4x16xf32>
    %179 = vector.shape_cast %167 : vector<2x4x4x16xf32> to vector<1x2x4x4x16xf32>
    tpu.vector_store %arg4[%c3_253, %c0_254, %c0_255, %c0_256, %c0_257], %179 {strides = array<i32>} : memref<4x2x4x4x16xf32, #tpu.memory_space<vmem>>, vector<1x2x4x4x16xf32>,
    return
  }
}

</mosaic_0001>

<llo_original>
// kernel: tpu_custom_call.1
$region0: #{tpu_custom_call.1}
  #allocation0 [shape = 'u32[]', space=smem, size = 0x4, offset = 0x4, fixed_abs, tag = 'smem constant byte address 0x4 - core index']
  #allocation1 [shape = 'u32[72,128]{1,0:T(1,128)}', space=vmem, size = 0x9000, scoped, tag = 'internal scratch']
  #allocation2 [shape = 'f32[2,6,6,32]{3,2,1,0:T(8,128)}', space=vmem, size = 0xc000, scoped, tag = 'scratch operand']
  #allocation3 [shape = 'f32[2,4,4,128]{3,2,1,0:T(4,128)}', space=vmem, size = 0x4000, scoped, tag = 'scratch operand']
  %s0 = inlined_call_operand.vmem [shape: f32[2,32], index: 0, kind: input, shape index: {}]
  %s1 = inlined_call_operand.vmem [shape: bf16[32,512], index: 1, kind: input, shape index: {}]
  %s2 = inlined_call_operand.vmem [shape: f32[1,512], index: 2, kind: input, shape index: {}]
  %s3 = inlined_call_operand.vmem [shape: bf16[4,128,16], index: 3, kind: input, shape index: {}]
  %s4 = inlined_call_operand.hbm [shape: f32[4,2,4,4,16], index: 4, kind: output, shape index: {}]
  %s5 = sld [smem:[#allocation0]]
  $region26: #{tpu_custom_call.1} parent=0
    _
  %s7 = ssub.s32 1, %s5
  %s8 = scalar_select 0, %s7, %s5
  $region1: #{tpu_custom_call.1} parent=0
    #allocation4 [shape = 'u8[65536]{0}', space=vmem, size = 0x10000, scoped, tag = 'output window, operand 0, single buffered']
    #allocation5 [shape = 's32[1]{0}', space=sflag, size = 0x4, scoped, tag = 'scoped memory for tpu_custom_call.1']
    %9 = vsyncpa [#allocation5], 0
    // Predicated region
    $region2: #{tpu_custom_call.1} parent=1 // pred_check
      _
    $region3: #{tpu_custom_call.1} parent=1 // pred_check_branch
      %11 = sbr.rel (0) target = $region5
    $region4: #{tpu_custom_call.1} parent=1 // pred_region
      _
    $region5: #{tpu_custom_call.1} parent=1 // pred_fallthru
      _
    // Predicated region
    $region6: #{tpu_custom_call.1} parent=1 // pred_check
      _
    $region7: #{tpu_custom_call.1} parent=1 // pred_check_branch
      %13 = sbr.rel (0) target = $region9
    $region8: #{tpu_custom_call.1} parent=1 // pred_region
      _
    $region9: #{tpu_custom_call.1} parent=1 // pred_fallthru
      _
    // Predicated region
    $region10: #{tpu_custom_call.1} parent=1 // pred_check
      _
    $region11: #{tpu_custom_call.1} parent=1 // pred_check_branch
      %15 = sbr.rel (0) target = $region13
    $region12: #{tpu_custom_call.1} parent=1 // pred_region
      _
    $region13: #{tpu_custom_call.1} parent=1 // pred_fallthru
      _
    // Predicated region
    $region14: #{tpu_custom_call.1} parent=1 // pred_check
      _
    $region15: #{tpu_custom_call.1} parent=1 // pred_check_branch
      %17 = sbr.rel (0) target = $region17
    $region16: #{tpu_custom_call.1} parent=1 // pred_region
      _
    $region17: #{tpu_custom_call.1} parent=1 // pred_fallthru
      _
    %vm19 = vcmask 259072
    %20 = vst.msk [vmem:[#allocation2] sm:$0x3f] %vm19, 0.0
    %21 = vst.msk [vmem:[#allocation2 + $0x8] sm:$0x3f] %vm19, 0.0
    %22 = vst.msk [vmem:[#allocation2 + $0x10] sm:$0x3f] %vm19, 0.0
    %23 = vst.msk [vmem:[#allocation2 + $0x18] sm:$0x3f] %vm19, 0.0
    %24 = vst.msk [vmem:[#allocation2 + $0x20] sm:$0x3f] %vm19, 0.0
    %25 = vst.msk [vmem:[#allocation2 + $0x28] sm:$0x3f] %vm19, 0.0
    %26 = vst.msk [vmem:[#allocation2 + $0x30] sm:$0x3f] %vm19, 0.0
    %27 = vst.msk [vmem:[#allocation2 + $0x38] sm:$0x3f] %vm19, 0.0
    %28 = vst.msk [vmem:[#allocation2 + $0x40] sm:$0x3f] %vm19, 0.0
    %29 = vst.msk [vmem:[#allocation2 + $0x48] sm:$0x3f] %vm19, 0.0
    %30 = vst.msk [vmem:[#allocation2 + $0x50] sm:$0x3f] %vm19, 0.0
    %31 = vst.msk [vmem:[#allocation2 + $0x58] sm:$0x3f] %vm19, 0.0
    %v32 = vld [vmem:[%s0] sm:$0x3]
    %v33 = vpack.c.bf16 %v32, %v32
    %v34 = vld [vmem:[%s1] sm:$0xff]
    %v35 = vld [vmem:[%s1 + $0x8] sm:$0xff]
    %v36 = vld [vmem:[%s1 + $0x10] sm:$0xff]
    %v37 = vld [vmem:[%s1 + $0x18] sm:$0xff]
    %v38 = vld [vmem:[%s1 + $0x20] sm:$0xff]
    %v39 = vld [vmem:[%s1 + $0x28] sm:$0xff]
    %v40 = vld [vmem:[%s1 + $0x30] sm:$0xff]
    %v41 = vld [vmem:[%s1 + $0x38] sm:$0xff]
    %v42 = vld [vmem:[%s2] sm:$0xf]
    %v44 = vperm.slane %v42, 0
    %v45 = vperm.slane %v42, 1
    %v46 = vperm.slane %v42, 2
    %v47 = vperm.slane %v42, 3
    %v60 = vunpack.c.l.b16 %v34
    %v61 = vunpack.c.h.b16 %v34
    %v62 = vunpack.c.l.b16 %v35
    %v63 = vunpack.c.h.b16 %v35
    %v64 = vunpack.c.l.b16 %v36
    %v65 = vunpack.c.h.b16 %v36
    %v66 = vunpack.c.l.b16 %v37
    %v67 = vunpack.c.h.b16 %v37
    %v68 = vunpack.c.l.b16 %v38
    %v69 = vunpack.c.h.b16 %v38
    %v70 = vunpack.c.l.b16 %v39
    %v71 = vunpack.c.h.b16 %v39
    %v72 = vunpack.c.l.b16 %v40
    %v73 = vunpack.c.h.b16 %v40
    %v74 = vunpack.c.l.b16 %v41
    %v75 = vunpack.c.h.b16 %v41
    %v76 = vpack.c.b16 %v64, %v60
    %v77 = vpack.c.b16 %v65, %v61
    %v78 = vpack.c.b16 %v66, %v62
    %v79 = vpack.c.b16 %v67, %v63
    %v80 = vpack.c.b16 %v72, %v68
    %v81 = vpack.c.b16 %v73, %v69
    %v82 = vpack.c.b16 %v74, %v70
    %v83 = vpack.c.b16 %v75, %v71
    %vm92 = vcmask 261120
    %v94 = vsel %vm92, %v33, 0
    %96 = vmatpush.bf16.msra.mxu0 0
    %97 = vmatpush.bf16.msra.mxu0 0
    %98 = vmatpush.bf16.msra.mxu0 0
    %99 = vmatpush.bf16.msra.mxu0 0
    %100 = vmatpush.bf16.msra.mxu0 0
    %101 = vmatpush.bf16.msra.mxu0 0
    %102 = vmatpush.bf16.msra.mxu0 %v80
    %103 = vmatpush.bf16.msra.mxu0 %v76
    %104 = vmatmul.bf16.gmra.mxu0 %v94
    %v105 = vpop.f32.mrf.mxu0
    %v106 = vadd.f32 %v44, %v105
    %v107 = vpop.f32.mrf.mxu0
    %108 = vdwg.mxu0
    %109 = vmatpush.bf16.msra.mxu0 0
    %110 = vmatpush.bf16.msra.mxu0 0
    %111 = vmatpush.bf16.msra.mxu0 0
    %112 = vmatpush.bf16.msra.mxu0 0
    %113 = vmatpush.bf16.msra.mxu0 0
    %114 = vmatpush.bf16.msra.mxu0 0
    %115 = vmatpush.bf16.msra.mxu0 %v81
    %116 = vmatpush.bf16.msra.mxu0 %v77
    %117 = vmatmul.bf16.gmra.mxu0 %v94
    %v118 = vpop.f32.mrf.mxu0
    %v119 = vadd.f32 %v45, %v118
    %v120 = vpop.f32.mrf.mxu0
    %121 = vdwg.mxu0
    %122 = vmatpush.bf16.msra.mxu0 0
    %123 = vmatpush.bf16.msra.mxu0 0
    %124 = vmatpush.bf16.msra.mxu0 0
    %125 = vmatpush.bf16.msra.mxu0 0
    %126 = vmatpush.bf16.msra.mxu0 0
    %127 = vmatpush.bf16.msra.mxu0 0
    %128 = vmatpush.bf16.msra.mxu0 %v82
    %129 = vmatpush.bf16.msra.mxu0 %v78
    %130 = vmatmul.bf16.gmra.mxu0 %v94
    %v131 = vpop.f32.mrf.mxu0
    %v132 = vadd.f32 %v46, %v131
    %v133 = vpop.f32.mrf.mxu0
    %134 = vdwg.mxu0
    %135 = vmatpush.bf16.msra.mxu0 0
    %136 = vmatpush.bf16.msra.mxu0 0
    %137 = vmatpush.bf16.msra.mxu0 0
    %138 = vmatpush.bf16.msra.mxu0 0
    %139 = vmatpush.bf16.msra.mxu0 0
    %140 = vmatpush.bf16.msra.mxu0 0
    %141 = vmatpush.bf16.msra.mxu0 %v83
    %142 = vmatpush.bf16.msra.mxu0 %v79
    %143 = vmatmul.bf16.gmra.mxu0 %v94
    %v144 = vpop.f32.mrf.mxu0
    %v145 = vadd.f32 %v47, %v144
    %v146 = vpop.f32.mrf.mxu0
    %147 = vdwg.mxu0
    %v149 = vrot.slane %v106, 1
    %s151 = scalar_lea.vmem [#allocation2], 8
    %vm152 = vcmask 253952
    %153 = vst.msk [vmem:[%s151 + $0x1] sm:$0x1] %vm152, %v106
    %154 = vst.msk [vmem:[%s151 + $0x31] sm:$0x1] %vm152, %v149
    %v155 = vperm.slane %v106, 0
    %v156 = vperm.slane %v149, 0
    %157 = vrot.lane.b32.xlu0 %v155, 96
    %v158 = vpop.permute.xlu0 %157
    %159 = vrot.lane.b32.xlu0 %v156, 96
    %v160 = vpop.permute.xlu0 %159
    %163 = vst.msk [vmem:[%s151 + $0x2] sm:$0x1] %vm152, %v158
    %164 = vst.msk [vmem:[%s151 + $0x32] sm:$0x1] %vm152, %v160
    %165 = vrot.lane.b32.xlu0 %v155, 64
    %v166 = vpop.permute.xlu0 %165
    %167 = vrot.lane.b32.xlu0 %v156, 64
    %v168 = vpop.permute.xlu0 %167
    %171 = vst.msk [vmem:[%s151 + $0x3] sm:$0x1] %vm152, %v166
    %172 = vst.msk [vmem:[%s151 + $0x33] sm:$0x1] %vm152, %v168
    %173 = vrot.lane.b32.xlu0 %v155, 32
    %v174 = vpop.permute.xlu0 %173
    %175 = vrot.lane.b32.xlu0 %v156, 32
    %v176 = vpop.permute.xlu0 %175
    %179 = vst.msk [vmem:[%s151 + $0x4] sm:$0x1] %vm152, %v174
    %180 = vst.msk [vmem:[%s151 + $0x34] sm:$0x1] %vm152, %v176
    %v182 = vrot.slane %v119, 1
    %s184 = scalar_lea.vmem [#allocation2], 16
    %185 = vst.msk [vmem:[%s184 + $0x1] sm:$0x1] %vm152, %v119
    %186 = vst.msk [vmem:[%s184 + $0x31] sm:$0x1] %vm152, %v182
    %v187 = vperm.slane %v119, 0
    %v188 = vperm.slane %v182, 0
    %189 = vrot.lane.b32.xlu0 %v187, 96
    %v190 = vpop.permute.xlu0 %189
    %191 = vrot.lane.b32.xlu0 %v188, 96
    %v192 = vpop.permute.xlu0 %191
    %195 = vst.msk [vmem:[%s184 + $0x2] sm:$0x1] %vm152, %v190
    %196 = vst.msk [vmem:[%s184 + $0x32] sm:$0x1] %vm152, %v192
    %197 = vrot.lane.b32.xlu0 %v187, 64
    %v198 = vpop.permute.xlu0 %197
    %199 = vrot.lane.b32.xlu0 %v188, 64
    %v200 = vpop.permute.xlu0 %199
    %203 = vst.msk [vmem:[%s184 + $0x3] sm:$0x1] %vm152, %v198
    %204 = vst.msk [vmem:[%s184 + $0x33] sm:$0x1] %vm152, %v200
    %205 = vrot.lane.b32.xlu0 %v187, 32
    %v206 = vpop.permute.xlu0 %205
    %207 = vrot.lane.b32.xlu0 %v188, 32
    %v208 = vpop.permute.xlu0 %207
    %211 = vst.msk [vmem:[%s184 + $0x4] sm:$0x1] %vm152, %v206
    %212 = vst.msk [vmem:[%s184 + $0x34] sm:$0x1] %vm152, %v208
    %v214 = vrot.slane %v132, 1
    %s216 = scalar_lea.vmem [#allocation2], 24
    %217 = vst.msk [vmem:[%s216 + $0x1] sm:$0x1] %vm152, %v132
    %218 = vst.msk [vmem:[%s216 + $0x31] sm:$0x1] %vm152, %v214
    %v219 = vperm.slane %v132, 0
    %v220 = vperm.slane %v214, 0
    %221 = vrot.lane.b32.xlu0 %v219, 96
    %v222 = vpop.permute.xlu0 %221
    %223 = vrot.lane.b32.xlu0 %v220, 96
    %v224 = vpop.permute.xlu0 %223
    %227 = vst.msk [vmem:[%s216 + $0x2] sm:$0x1] %vm152, %v222
    %228 = vst.msk [vmem:[%s216 + $0x32] sm:$0x1] %vm152, %v224
    %229 = vrot.lane.b32.xlu0 %v219, 64
    %v230 = vpop.permute.xlu0 %229
    %231 = vrot.lane.b32.xlu0 %v220, 64
    %v232 = vpop.permute.xlu0 %231
    %235 = vst.msk [vmem:[%s216 + $0x3] sm:$0x1] %vm152, %v230
    %236 = vst.msk [vmem:[%s216 + $0x33] sm:$0x1] %vm152, %v232
    %237 = vrot.lane.b32.xlu0 %v219, 32
    %v238 = vpop.permute.xlu0 %237
    %239 = vrot.lane.b32.xlu0 %v220, 32
    %v240 = vpop.permute.xlu0 %239
    %243 = vst.msk [vmem:[%s216 + $0x4] sm:$0x1] %vm152, %v238
    %244 = vst.msk [vmem:[%s216 + $0x34] sm:$0x1] %vm152, %v240
    %v246 = vrot.slane %v145, 1
    %s248 = scalar_lea.vmem [#allocation2], 32
    %249 = vst.msk [vmem:[%s248 + $0x1] sm:$0x1] %vm152, %v145
    %250 = vst.msk [vmem:[%s248 + $0x31] sm:$0x1] %vm152, %v246
    %v251 = vperm.slane %v145, 0
    %v252 = vperm.slane %v246, 0
    %253 = vrot.lane.b32.xlu0 %v251, 96
    %v254 = vpop.permute.xlu0 %253
    %255 = vrot.lane.b32.xlu0 %v252, 96
    %v256 = vpop.permute.xlu0 %255
    %259 = vst.msk [vmem:[%s248 + $0x2] sm:$0x1] %vm152, %v254
    %260 = vst.msk [vmem:[%s248 + $0x32] sm:$0x1] %vm152, %v256
    %261 = vrot.lane.b32.xlu0 %v251, 64
    %v262 = vpop.permute.xlu0 %261
    %263 = vrot.lane.b32.xlu0 %v252, 64
    %v264 = vpop.permute.xlu0 %263
    %267 = vst.msk [vmem:[%s248 + $0x3] sm:$0x1] %vm152, %v262
    %268 = vst.msk [vmem:[%s248 + $0x33] sm:$0x1] %vm152, %v264
    %269 = vrot.lane.b32.xlu0 %v251, 32
    %v270 = vpop.permute.xlu0 %269
    %271 = vrot.lane.b32.xlu0 %v252, 32
    %v272 = vpop.permute.xlu0 %271
    %275 = vst.msk [vmem:[%s248 + $0x4] sm:$0x1] %vm152, %v270
    %276 = vst.msk [vmem:[%s248 + $0x34] sm:$0x1] %vm152, %v272
    %v277 = vld [vmem:[#allocation2] sm:$0xf]
    %v278 = vld [vmem:[#allocation2 + $0x8] sm:$0xf]
    %v279 = vld [vmem:[#allocation2 + $0x10] sm:$0xf]
    %v280 = vld [vmem:[#allocation2 + $0x18] sm:$0xf]
    %v281 = vld [vmem:[#allocation2 + $0x30] sm:$0xf]
    %v282 = vld [vmem:[#allocation2 + $0x38] sm:$0xf]
    %v283 = vld [vmem:[#allocation2 + $0x40] sm:$0xf]
    %v284 = vld [vmem:[#allocation2 + $0x48] sm:$0xf]
    %vm285 = vcmask 257024
    %286 = vst.msk [vmem:[#allocation3] sm:$0xf] %vm285, %v277
    %287 = vst.msk [vmem:[#allocation3 + $0x4] sm:$0xf] %vm285, %v278
    %288 = vst.msk [vmem:[#allocation3 + $0x8] sm:$0xf] %vm285, %v279
    %289 = vst.msk [vmem:[#allocation3 + $0xc] sm:$0xf] %vm285, %v280
    %290 = vst.msk [vmem:[#allocation3 + $0x10] sm:$0xf] %vm285, %v281
    %291 = vst.msk [vmem:[#allocation3 + $0x14] sm:$0xf] %vm285, %v282
    %292 = vst.msk [vmem:[#allocation3 + $0x18] sm:$0xf] %vm285, %v283
    %293 = vst.msk [vmem:[#allocation3 + $0x1c] sm:$0xf] %vm285, %v284
    %v294 = vld [vmem:[#allocation2 + $0x1] sm:$0xf]
    %v295 = vld [vmem:[#allocation2 + $0x9] sm:$0xf]
    %v296 = vld [vmem:[#allocation2 + $0x11] sm:$0xf]
    %v297 = vld [vmem:[#allocation2 + $0x19] sm:$0xf]
    %v298 = vld [vmem:[#allocation2 + $0x31] sm:$0xf]
    %v299 = vld [vmem:[#allocation2 + $0x39] sm:$0xf]
    %v300 = vld [vmem:[#allocation2 + $0x41] sm:$0xf]
    %v301 = vld [vmem:[#allocation2 + $0x49] sm:$0xf]
    %310 = vrot.lane.b32.xlu0 %v294, 32
    %v311 = vpop.permute.xlu0 %310
    %312 = vrot.lane.b32.xlu0 %v295, 32
    %v313 = vpop.permute.xlu0 %312
    %314 = vrot.lane.b32.xlu0 %v296, 32
    %v315 = vpop.permute.xlu0 %314
    %316 = vrot.lane.b32.xlu0 %v297, 32
    %v317 = vpop.permute.xlu0 %316
    %318 = vrot.lane.b32.xlu0 %v298, 32
    %v319 = vpop.permute.xlu0 %318
    %320 = vrot.lane.b32.xlu0 %v299, 32
    %v321 = vpop.permute.xlu0 %320
    %322 = vrot.lane.b32.xlu0 %v300, 32
    %v323 = vpop.permute.xlu0 %322
    %324 = vrot.lane.b32.xlu0 %v301, 32
    %v325 = vpop.permute.xlu0 %324
    %vm334 = vcmask 519424
    %335 = vst.msk [vmem:[#allocation3] sm:$0xf] %vm334, %v311
    %336 = vst.msk [vmem:[#allocation3 + $0x4] sm:$0xf] %vm334, %v313
    %337 = vst.msk [vmem:[#allocation3 + $0x8] sm:$0xf] %vm334, %v315
    %338 = vst.msk [vmem:[#allocation3 + $0xc] sm:$0xf] %vm334, %v317
    %339 = vst.msk [vmem:[#allocation3 + $0x10] sm:$0xf] %vm334, %v319
    %340 = vst.msk [vmem:[#allocation3 + $0x14] sm:$0xf] %vm334, %v321
    %341 = vst.msk [vmem:[#allocation3 + $0x18] sm:$0xf] %vm334, %v323
    %342 = vst.msk [vmem:[#allocation3 + $0x1c] sm:$0xf] %vm334, %v325
    %v343 = vld [vmem:[%s151] sm:$0xf]
    %v344 = vld [vmem:[%s151 + $0x8] sm:$0xf]
    %v345 = vld [vmem:[%s151 + $0x10] sm:$0xf]
    %v346 = vld [vmem:[%s151 + $0x18] sm:$0xf]
    %v347 = vld [vmem:[%s151 + $0x30] sm:$0xf]
    %v348 = vld [vmem:[%s151 + $0x38] sm:$0xf]
    %v349 = vld [vmem:[%s151 + $0x40] sm:$0xf]
    %v350 = vld [vmem:[%s151 + $0x48] sm:$0xf]
    %359 = vrot.lane.b32.xlu0 %v343, 64
    %v360 = vpop.permute.xlu0 %359
    %361 = vrot.lane.b32.xlu0 %v344, 64
    %v362 = vpop.permute.xlu0 %361
    %363 = vrot.lane.b32.xlu0 %v345, 64
    %v364 = vpop.permute.xlu0 %363
    %365 = vrot.lane.b32.xlu0 %v346, 64
    %v366 = vpop.permute.xlu0 %365
    %367 = vrot.lane.b32.xlu0 %v347, 64
    %v368 = vpop.permute.xlu0 %367
    %369 = vrot.lane.b32.xlu0 %v348, 64
    %v370 = vpop.permute.xlu0 %369
    %371 = vrot.lane.b32.xlu0 %v349, 64
    %v372 = vpop.permute.xlu0 %371
    %373 = vrot.lane.b32.xlu0 %v350, 64
    %v374 = vpop.permute.xlu0 %373
    %vm383 = vcmask 781824
    %384 = vst.msk [vmem:[#allocation3] sm:$0xf] %vm383, %v360
    %385 = vst.msk [vmem:[#allocation3 + $0x4] sm:$0xf] %vm383, %v362
    %386 = vst.msk [vmem:[#allocation3 + $0x8] sm:$0xf] %vm383, %v364
    %387 = vst.msk [vmem:[#allocation3 + $0xc] sm:$0xf] %vm383, %v366
    %388 = vst.msk [vmem:[#allocation3 + $0x10] sm:$0xf] %vm383, %v368
    %389 = vst.msk [vmem:[#allocation3 + $0x14] sm:$0xf] %vm383, %v370
    %390 = vst.msk [vmem:[#allocation3 + $0x18] sm:$0xf] %vm383, %v372
    %391 = vst.msk [vmem:[#allocation3 + $0x1c] sm:$0xf] %vm383, %v374
    %v392 = vld [vmem:[%s151 + $0x1] sm:$0xf]
    %v393 = vld [vmem:[%s151 + $0x9] sm:$0xf]
    %v394 = vld [vmem:[%s151 + $0x11] sm:$0xf]
    %v395 = vld [vmem:[%s151 + $0x19] sm:$0xf]
    %v396 = vld [vmem:[%s151 + $0x31] sm:$0xf]
    %v397 = vld [vmem:[%s151 + $0x39] sm:$0xf]
    %v398 = vld [vmem:[%s151 + $0x41] sm:$0xf]
    %v399 = vld [vmem:[%s151 + $0x49] sm:$0xf]
    %408 = vrot.lane.b32.xlu0 %v392, 96
    %v409 = vpop.permute.xlu0 %408
    %410 = vrot.lane.b32.xlu0 %v393, 96
    %v411 = vpop.permute.xlu0 %410
    %412 = vrot.lane.b32.xlu0 %v394, 96
    %v413 = vpop.permute.xlu0 %412
    %414 = vrot.lane.b32.xlu0 %v395, 96
    %v415 = vpop.permute.xlu0 %414
    %416 = vrot.lane.b32.xlu0 %v396, 96
    %v417 = vpop.permute.xlu0 %416
    %418 = vrot.lane.b32.xlu0 %v397, 96
    %v419 = vpop.permute.xlu0 %418
    %420 = vrot.lane.b32.xlu0 %v398, 96
    %v421 = vpop.permute.xlu0 %420
    %422 = vrot.lane.b32.xlu0 %v399, 96
    %v423 = vpop.permute.xlu0 %422
    %vm432 = vcmask 1044224
    %433 = vst.msk [vmem:[#allocation3] sm:$0xf] %vm432, %v409
    %434 = vst.msk [vmem:[#allocation3 + $0x4] sm:$0xf] %vm432, %v411
    %435 = vst.msk [vmem:[#allocation3 + $0x8] sm:$0xf] %vm432, %v413
    %436 = vst.msk [vmem:[#allocation3 + $0xc] sm:$0xf] %vm432, %v415
    %437 = vst.msk [vmem:[#allocation3 + $0x10] sm:$0xf] %vm432, %v417
    %438 = vst.msk [vmem:[#allocation3 + $0x14] sm:$0xf] %vm432, %v419
    %439 = vst.msk [vmem:[#allocation3 + $0x18] sm:$0xf] %vm432, %v421
    %440 = vst.msk [vmem:[#allocation3 + $0x1c] sm:$0xf] %vm432, %v423
    %v441 = vld [vmem:[#allocation3] sm:$0xf]
    %v442 = vld [vmem:[#allocation3 + $0x4] sm:$0xf]
    %v443 = vld [vmem:[#allocation3 + $0x8] sm:$0xf]
    %v444 = vld [vmem:[#allocation3 + $0xc] sm:$0xf]
    %v445 = vld [vmem:[#allocation3 + $0x10] sm:$0xf]
    %v446 = vld [vmem:[#allocation3 + $0x14] sm:$0xf]
    %v447 = vld [vmem:[#allocation3 + $0x18] sm:$0xf]
    %v448 = vld [vmem:[#allocation3 + $0x1c] sm:$0xf]
    %457 = vst [vmem:[#allocation1] ss:$2 sm:$0xff] %v441
    %s458 = scalar_lea.vmem [#allocation1], 1
    %459 = vst [vmem:[%s458] ss:$2 sm:$0xff] %v442
    %s460 = scalar_lea.vmem [#allocation1], 16
    %461 = vst [vmem:[%s460] ss:$2 sm:$0xff] %v443
    %s462 = scalar_lea.vmem [#allocation1], 17
    %463 = vst [vmem:[%s462] ss:$2 sm:$0xff] %v444
    %s464 = scalar_lea.vmem [#allocation1], 32
    %465 = vst [vmem:[%s464] ss:$2 sm:$0xff] %v445
    %s466 = scalar_lea.vmem [#allocation1], 33
    %467 = vst [vmem:[%s466] ss:$2 sm:$0xff] %v446
    %s468 = scalar_lea.vmem [#allocation1], 48
    %469 = vst [vmem:[%s468] ss:$2 sm:$0xff] %v447
    %s470 = scalar_lea.vmem [#allocation1], 49
    %471 = vst [vmem:[%s470] ss:$2 sm:$0xff] %v448
    %v472 = vld.sshfl [vmem:[#allocation1] sm:$0xff pattern:$0x75316420]
    %v473 = vld.sshfl [vmem:[#allocation1 + $0x10] sm:$0xff pattern:$0x75316420]
    %v474 = vld.sshfl [vmem:[#allocation1 + $0x20] sm:$0xff pattern:$0x75316420]
    %v475 = vld.sshfl [vmem:[#allocation1 + $0x30] sm:$0xff pattern:$0x75316420]
    %v480 = vpack.c.bf16 %v473, %v472
    %v481 = vpack.c.bf16 %v475, %v474
    %v482 = vld [vmem:[%s3] sm:$0xf]
    %v483 = vld [vmem:[%s3 + $0x4] sm:$0xf]
    %v484 = vld [vmem:[%s3 + $0x8] sm:$0xf]
    %v485 = vld [vmem:[%s3 + $0xc] sm:$0xf]
    %v486 = vld [vmem:[%s3 + $0x10] sm:$0xf]
    %v487 = vld [vmem:[%s3 + $0x14] sm:$0xf]
    %v488 = vld [vmem:[%s3 + $0x18] sm:$0xf]
    %v489 = vld [vmem:[%s3 + $0x1c] sm:$0xf]
    %v490 = vld [vmem:[%s3 + $0x20] sm:$0xf]
    %v491 = vld [vmem:[%s3 + $0x24] sm:$0xf]
    %v492 = vld [vmem:[%s3 + $0x28] sm:$0xf]
    %v493 = vld [vmem:[%s3 + $0x2c] sm:$0xf]
    %v494 = vld [vmem:[%s3 + $0x30] sm:$0xf]
    %v495 = vld [vmem:[%s3 + $0x34] sm:$0xf]
    %v496 = vld [vmem:[%s3 + $0x38] sm:$0xf]
    %v497 = vld [vmem:[%s3 + $0x3c] sm:$0xf]
    %v514 = vunpack.c.l.b16 %v482
    %v515 = vunpack.c.l.b16 %v483
    %v516 = vunpack.c.l.b16 %v484
    %v517 = vunpack.c.l.b16 %v485
    %v518 = vunpack.c.l.b16 %v486
    %v519 = vunpack.c.l.b16 %v487
    %v520 = vunpack.c.l.b16 %v488
    %v521 = vunpack.c.l.b16 %v489
    %v522 = vunpack.c.l.b16 %v490
    %v523 = vunpack.c.l.b16 %v491
    %v524 = vunpack.c.l.b16 %v492
    %v525 = vunpack.c.l.b16 %v493
    %v526 = vunpack.c.l.b16 %v494
    %v527 = vunpack.c.l.b16 %v495
    %v528 = vunpack.c.l.b16 %v496
    %v529 = vunpack.c.l.b16 %v497
    %v530 = vpack.c.b16 %v515, %v514
    %v531 = vpack.c.b16 %v517, %v516
    %v532 = vpack.c.b16 %v519, %v518
    %v533 = vpack.c.b16 %v521, %v520
    %v534 = vpack.c.b16 %v523, %v522
    %v535 = vpack.c.b16 %v525, %v524
    %v536 = vpack.c.b16 %v527, %v526
    %v537 = vpack.c.b16 %v529, %v528
    %546 = vmatpush.bf16.msra.mxu0 %v537
    %547 = vmatpush.bf16.msra.mxu0 %v536
    %548 = vmatpush.bf16.msra.mxu0 %v535
    %549 = vmatpush.bf16.msra.mxu0 %v534
    %550 = vmatpush.bf16.msra.mxu0 %v533
    %551 = vmatpush.bf16.msra.mxu0 %v532
    %552 = vmatpush.bf16.msra.mxu0 %v531
    %553 = vmatpush.bf16.msra.mxu0 %v530
    %554 = vmatmul.bf16.gmra.mxu0 %v480
    %v555 = vpop.f32.mrf.mxu0
    %v556 = vadd.f32 0.0, %v555
    %v557 = vpop.f32.mrf.mxu0
    %v558 = vadd.f32 0.0, %v557
    %559 = vmatmul.bf16.gmra.mxu0 %v481
    %v560 = vpop.f32.mrf.mxu0
    %v561 = vadd.f32 0.0, %v560
    %v562 = vpop.f32.mrf.mxu0
    %v563 = vadd.f32 0.0, %v562
    %564 = vdwg.mxu0
    %v569 = vrot.slane %v556, 4
    %v570 = vrot.slane %v558, 4
    %v571 = vrot.slane %v561, 4
    %v572 = vrot.slane %v563, 4
    %v577 = vld [vmem:[#allocation2 + $0x1] sm:$0xf]
    %v578 = vld [vmem:[#allocation2 + $0x9] sm:$0xf]
    %v579 = vld [vmem:[#allocation2 + $0x11] sm:$0xf]
    %v580 = vld [vmem:[#allocation2 + $0x19] sm:$0xf]
    %v581 = vld [vmem:[#allocation2 + $0x31] sm:$0xf]
    %v582 = vld [vmem:[#allocation2 + $0x39] sm:$0xf]
    %v583 = vld [vmem:[#allocation2 + $0x41] sm:$0xf]
    %v584 = vld [vmem:[#allocation2 + $0x49] sm:$0xf]
    %585 = vst.msk [vmem:[#allocation3] sm:$0xf] %vm285, %v577
    %586 = vst.msk [vmem:[#allocation3 + $0x4] sm:$0xf] %vm285, %v578
    %587 = vst.msk [vmem:[#allocation3 + $0x8] sm:$0xf] %vm285, %v579
    %588 = vst.msk [vmem:[#allocation3 + $0xc] sm:$0xf] %vm285, %v580
    %589 = vst.msk [vmem:[#allocation3 + $0x10] sm:$0xf] %vm285, %v581
    %590 = vst.msk [vmem:[#allocation3 + $0x14] sm:$0xf] %vm285, %v582
    %591 = vst.msk [vmem:[#allocation3 + $0x18] sm:$0xf] %vm285, %v583
    %592 = vst.msk [vmem:[#allocation3 + $0x1c] sm:$0xf] %vm285, %v584
    %v593 = vld [vmem:[#allocation2 + $0x2] sm:$0xf]
    %v594 = vld [vmem:[#allocation2 + $0xa] sm:$0xf]
    %v595 = vld [vmem:[#allocation2 + $0x12] sm:$0xf]
    %v596 = vld [vmem:[#allocation2 + $0x1a] sm:$0xf]
    %v597 = vld [vmem:[#allocation2 + $0x32] sm:$0xf]
    %v598 = vld [vmem:[#allocation2 + $0x3a] sm:$0xf]
    %v599 = vld [vmem:[#allocation2 + $0x42] sm:$0xf]
    %v600 = vld [vmem:[#allocation2 + $0x4a] sm:$0xf]
    %609 = vrot.lane.b32.xlu0 %v593, 32
    %v610 = vpop.permute.xlu0 %609
    %611 = vrot.lane.b32.xlu0 %v594, 32
    %v612 = vpop.permute.xlu0 %611
    %613 = vrot.lane.b32.xlu0 %v595, 32
    %v614 = vpop.permute.xlu0 %613
    %615 = vrot.lane.b32.xlu0 %v596, 32
    %v616 = vpop.permute.xlu0 %615
    %617 = vrot.lane.b32.xlu0 %v597, 32
    %v618 = vpop.permute.xlu0 %617
    %619 = vrot.lane.b32.xlu0 %v598, 32
    %v620 = vpop.permute.xlu0 %619
    %621 = vrot.lane.b32.xlu0 %v599, 32
    %v622 = vpop.permute.xlu0 %621
    %623 = vrot.lane.b32.xlu0 %v600, 32
    %v624 = vpop.permute.xlu0 %623
    %633 = vst.msk [vmem:[#allocation3] sm:$0xf] %vm334, %v610
    %634 = vst.msk [vmem:[#allocation3 + $0x4] sm:$0xf] %vm334, %v612
    %635 = vst.msk [vmem:[#allocation3 + $0x8] sm:$0xf] %vm334, %v614
    %636 = vst.msk [vmem:[#allocation3 + $0xc] sm:$0xf] %vm334, %v616
    %637 = vst.msk [vmem:[#allocation3 + $0x10] sm:$0xf] %vm334, %v618
    %638 = vst.msk [vmem:[#allocation3 + $0x14] sm:$0xf] %vm334, %v620
    %639 = vst.msk [vmem:[#allocation3 + $0x18] sm:$0xf] %vm334, %v622
    %640 = vst.msk [vmem:[#allocation3 + $0x1c] sm:$0xf] %vm334, %v624
    %v641 = vld [vmem:[%s151 + $0x1] sm:$0xf]
    %v642 = vld [vmem:[%s151 + $0x9] sm:$0xf]
    %v643 = vld [vmem:[%s151 + $0x11] sm:$0xf]
    %v644 = vld [vmem:[%s151 + $0x19] sm:$0xf]
    %v645 = vld [vmem:[%s151 + $0x31] sm:$0xf]
    %v646 = vld [vmem:[%s151 + $0x39] sm:$0xf]
    %v647 = vld [vmem:[%s151 + $0x41] sm:$0xf]
    %v648 = vld [vmem:[%s151 + $0x49] sm:$0xf]
    %657 = vrot.lane.b32.xlu0 %v641, 64
    %v658 = vpop.permute.xlu0 %657
    %659 = vrot.lane.b32.xlu0 %v642, 64
    %v660 = vpop.permute.xlu0 %659
    %661 = vrot.lane.b32.xlu0 %v643, 64
    %v662 = vpop.permute.xlu0 %661
    %663 = vrot.lane.b32.xlu0 %v644, 64
    %v664 = vpop.permute.xlu0 %663
    %665 = vrot.lane.b32.xlu0 %v645, 64
    %v666 = vpop.permute.xlu0 %665
    %667 = vrot.lane.b32.xlu0 %v646, 64
    %v668 = vpop.permute.xlu0 %667
    %669 = vrot.lane.b32.xlu0 %v647, 64
    %v670 = vpop.permute.xlu0 %669
    %671 = vrot.lane.b32.xlu0 %v648, 64
    %v672 = vpop.permute.xlu0 %671
    %681 = vst.msk [vmem:[#allocation3] sm:$0xf] %vm383, %v658
    %682 = vst.msk [vmem:[#allocation3 + $0x4] sm:$0xf] %vm383, %v660
    %683 = vst.msk [vmem:[#allocation3 + $0x8] sm:$0xf] %vm383, %v662
    %684 = vst.msk [vmem:[#allocation3 + $0xc] sm:$0xf] %vm383, %v664
    %685 = vst.msk [vmem:[#allocation3 + $0x10] sm:$0xf] %vm383, %v666
    %686 = vst.msk [vmem:[#allocation3 + $0x14] sm:$0xf] %vm383, %v668
    %687 = vst.msk [vmem:[#allocation3 + $0x18] sm:$0xf] %vm383, %v670
    %688 = vst.msk [vmem:[#allocation3 + $0x1c] sm:$0xf] %vm383, %v672
    %v689 = vld [vmem:[%s151 + $0x2] sm:$0xf]
    %v690 = vld [vmem:[%s151 + $0xa] sm:$0xf]
    %v691 = vld [vmem:[%s151 + $0x12] sm:$0xf]
    %v692 = vld [vmem:[%s151 + $0x1a] sm:$0xf]
    %v693 = vld [vmem:[%s151 + $0x32] sm:$0xf]
    %v694 = vld [vmem:[%s151 + $0x3a] sm:$0xf]
    %v695 = vld [vmem:[%s151 + $0x42] sm:$0xf]
    %v696 = vld [vmem:[%s151 + $0x4a] sm:$0xf]
    %705 = vrot.lane.b32.xlu0 %v689, 96
    %v706 = vpop.permute.xlu0 %705
    %707 = vrot.lane.b32.xlu0 %v690, 96
    %v708 = vpop.permute.xlu0 %707
    %709 = vrot.lane.b32.xlu0 %v691, 96
    %v710 = vpop.permute.xlu0 %709
    %711 = vrot.lane.b32.xlu0 %v692, 96
    %v712 = vpop.permute.xlu0 %711
    %713 = vrot.lane.b32.xlu0 %v693, 96
    %v714 = vpop.permute.xlu0 %713
    %715 = vrot.lane.b32.xlu0 %v694, 96
    %v716 = vpop.permute.xlu0 %715
    %717 = vrot.lane.b32.xlu0 %v695, 96
    %v718 = vpop.permute.xlu0 %717
    %719 = vrot.lane.b32.xlu0 %v696, 96
    %v720 = vpop.permute.xlu0 %719
    %729 = vst.msk [vmem:[#allocation3] sm:$0xf] %vm432, %v706
    %730 = vst.msk [vmem:[#allocation3 + $0x4] sm:$0xf] %vm432, %v708
    %731 = vst.msk [vmem:[#allocation3 + $0x8] sm:$0xf] %vm432, %v710
    %732 = vst.msk [vmem:[#allocation3 + $0xc] sm:$0xf] %vm432, %v712
    %733 = vst.msk [vmem:[#allocation3 + $0x10] sm:$0xf] %vm432, %v714
    %734 = vst.msk [vmem:[#allocation3 + $0x14] sm:$0xf] %vm432, %v716
    %735 = vst.msk [vmem:[#allocation3 + $0x18] sm:$0xf] %vm432, %v718
    %736 = vst.msk [vmem:[#allocation3 + $0x1c] sm:$0xf] %vm432, %v720
    %v737 = vld [vmem:[#allocation3] sm:$0xf]
    %v738 = vld [vmem:[#allocation3 + $0x4] sm:$0xf]
    %v739 = vld [vmem:[#allocation3 + $0x8] sm:$0xf]
    %v740 = vld [vmem:[#allocation3 + $0xc] sm:$0xf]
    %v741 = vld [vmem:[#allocation3 + $0x10] sm:$0xf]
    %v742 = vld [vmem:[#allocation3 + $0x14] sm:$0xf]
    %v743 = vld [vmem:[#allocation3 + $0x18] sm:$0xf]
    %v744 = vld [vmem:[#allocation3 + $0x1c] sm:$0xf]
    %753 = vst [vmem:[#allocation1] ss:$2 sm:$0xff] %v737
    %s754 = scalar_lea.vmem [#allocation1], 1
    %755 = vst [vmem:[%s754] ss:$2 sm:$0xff] %v738
    %s756 = scalar_lea.vmem [#allocation1], 16
    %757 = vst [vmem:[%s756] ss:$2 sm:$0xff] %v739
    %s758 = scalar_lea.vmem [#allocation1], 17
    %759 = vst [vmem:[%s758] ss:$2 sm:$0xff] %v740
    %s760 = scalar_lea.vmem [#allocation1], 32
    %761 = vst [vmem:[%s760] ss:$2 sm:$0xff] %v741
    %s762 = scalar_lea.vmem [#allocation1], 33
    %763 = vst [vmem:[%s762] ss:$2 sm:$0xff] %v742
    %s764 = scalar_lea.vmem [#allocation1], 48
    %765 = vst [vmem:[%s764] ss:$2 sm:$0xff] %v743
    %s766 = scalar_lea.vmem [#allocation1], 49
    %767 = vst [vmem:[%s766] ss:$2 sm:$0xff] %v744
    %v768 = vld.sshfl [vmem:[#allocation1] sm:$0xff pattern:$0x75316420]
    %v769 = vld.sshfl [vmem:[#allocation1 + $0x10] sm:$0xff pattern:$0x75316420]
    %v770 = vld.sshfl [vmem:[#allocation1 + $0x20] sm:$0xff pattern:$0x75316420]
    %v771 = vld.sshfl [vmem:[#allocation1 + $0x30] sm:$0xff pattern:$0x75316420]
    %v776 = vpack.c.bf16 %v769, %v768
    %v777 = vpack.c.bf16 %v771, %v770
    %s778 = scalar_lea.vmem %s3, 64
    %v779 = vld [vmem:[%s778] sm:$0xf]
    %v780 = vld [vmem:[%s778 + $0x4] sm:$0xf]
    %v781 = vld [vmem:[%s778 + $0x8] sm:$0xf]
    %v782 = vld [vmem:[%s778 + $0xc] sm:$0xf]
    %v783 = vld [vmem:[%s778 + $0x10] sm:$0xf]
    %v784 = vld [vmem:[%s778 + $0x14] sm:$0xf]
    %v785 = vld [vmem:[%s778 + $0x18] sm:$0xf]
    %v786 = vld [vmem:[%s778 + $0x1c] sm:$0xf]
    %v787 = vld [vmem:[%s778 + $0x20] sm:$0xf]
    %v788 = vld [vmem:[%s778 + $0x24] sm:$0xf]
    %v789 = vld [vmem:[%s778 + $0x28] sm:$0xf]
    %v790 = vld [vmem:[%s778 + $0x2c] sm:$0xf]
    %v791 = vld [vmem:[%s778 + $0x30] sm:$0xf]
    %v792 = vld [vmem:[%s778 + $0x34] sm:$0xf]
    %v793 = vld [vmem:[%s778 + $0x38] sm:$0xf]
    %v794 = vld [vmem:[%s778 + $0x3c] sm:$0xf]
    %v811 = vunpack.c.l.b16 %v779
    %v812 = vunpack.c.l.b16 %v780
    %v813 = vunpack.c.l.b16 %v781
    %v814 = vunpack.c.l.b16 %v782
    %v815 = vunpack.c.l.b16 %v783
    %v816 = vunpack.c.l.b16 %v784
    %v817 = vunpack.c.l.b16 %v785
    %v818 = vunpack.c.l.b16 %v786
    %v819 = vunpack.c.l.b16 %v787
    %v820 = vunpack.c.l.b16 %v788
    %v821 = vunpack.c.l.b16 %v789
    %v822 = vunpack.c.l.b16 %v790
    %v823 = vunpack.c.l.b16 %v791
    %v824 = vunpack.c.l.b16 %v792
    %v825 = vunpack.c.l.b16 %v793
    %v826 = vunpack.c.l.b16 %v794
    %v827 = vpack.c.b16 %v812, %v811
    %v828 = vpack.c.b16 %v814, %v813
    %v829 = vpack.c.b16 %v816, %v815
    %v830 = vpack.c.b16 %v818, %v817
    %v831 = vpack.c.b16 %v820, %v819
    %v832 = vpack.c.b16 %v822, %v821
    %v833 = vpack.c.b16 %v824, %v823
    %v834 = vpack.c.b16 %v826, %v825
    %843 = vmatpush.bf16.msra.mxu0 %v834
    %844 = vmatpush.bf16.msra.mxu0 %v833
    %845 = vmatpush.bf16.msra.mxu0 %v832
    %846 = vmatpush.bf16.msra.mxu0 %v831
    %847 = vmatpush.bf16.msra.mxu0 %v830
    %848 = vmatpush.bf16.msra.mxu0 %v829
    %849 = vmatpush.bf16.msra.mxu0 %v828
    %850 = vmatpush.bf16.msra.mxu0 %v827
    %851 = vmatmul.bf16.gmra.mxu0 %v776
    %v852 = vpop.f32.mrf.mxu0
    %v853 = vadd.f32 0.0, %v852
    %v854 = vpop.f32.mrf.mxu0
    %v855 = vadd.f32 0.0, %v854
    %856 = vmatmul.bf16.gmra.mxu0 %v777
    %v857 = vpop.f32.mrf.mxu0
    %v858 = vadd.f32 0.0, %v857
    %v859 = vpop.f32.mrf.mxu0
    %v860 = vadd.f32 0.0, %v859
    %861 = vdwg.mxu0
    %v866 = vrot.slane %v853, 4
    %v867 = vrot.slane %v855, 4
    %v868 = vrot.slane %v858, 4
    %v869 = vrot.slane %v860, 4
    %v874 = vld [vmem:[%s151] sm:$0xf]
    %v875 = vld [vmem:[%s151 + $0x8] sm:$0xf]
    %v876 = vld [vmem:[%s151 + $0x10] sm:$0xf]
    %v877 = vld [vmem:[%s151 + $0x18] sm:$0xf]
    %v878 = vld [vmem:[%s151 + $0x30] sm:$0xf]
    %v879 = vld [vmem:[%s151 + $0x38] sm:$0xf]
    %v880 = vld [vmem:[%s151 + $0x40] sm:$0xf]
    %v881 = vld [vmem:[%s151 + $0x48] sm:$0xf]
    %882 = vst.msk [vmem:[#allocation3] sm:$0xf] %vm285, %v874
    %883 = vst.msk [vmem:[#allocation3 + $0x4] sm:$0xf] %vm285, %v875
    %884 = vst.msk [vmem:[#allocation3 + $0x8] sm:$0xf] %vm285, %v876
    %885 = vst.msk [vmem:[#allocation3 + $0xc] sm:$0xf] %vm285, %v877
    %886 = vst.msk [vmem:[#allocation3 + $0x10] sm:$0xf] %vm285, %v878
    %887 = vst.msk [vmem:[#allocation3 + $0x14] sm:$0xf] %vm285, %v879
    %888 = vst.msk [vmem:[#allocation3 + $0x18] sm:$0xf] %vm285, %v880
    %889 = vst.msk [vmem:[#allocation3 + $0x1c] sm:$0xf] %vm285, %v881
    %v890 = vld [vmem:[%s151 + $0x1] sm:$0xf]
    %v891 = vld [vmem:[%s151 + $0x9] sm:$0xf]
    %v892 = vld [vmem:[%s151 + $0x11] sm:$0xf]
    %v893 = vld [vmem:[%s151 + $0x19] sm:$0xf]
    %v894 = vld [vmem:[%s151 + $0x31] sm:$0xf]
    %v895 = vld [vmem:[%s151 + $0x39] sm:$0xf]
    %v896 = vld [vmem:[%s151 + $0x41] sm:$0xf]
    %v897 = vld [vmem:[%s151 + $0x49] sm:$0xf]
    %906 = vrot.lane.b32.xlu0 %v890, 32
    %v907 = vpop.permute.xlu0 %906
    %908 = vrot.lane.b32.xlu0 %v891, 32
    %v909 = vpop.permute.xlu0 %908
    %910 = vrot.lane.b32.xlu0 %v892, 32
    %v911 = vpop.permute.xlu0 %910
    %912 = vrot.lane.b32.xlu0 %v893, 32
    %v913 = vpop.permute.xlu0 %912
    %914 = vrot.lane.b32.xlu0 %v894, 32
    %v915 = vpop.permute.xlu0 %914
    %916 = vrot.lane.b32.xlu0 %v895, 32
    %v917 = vpop.permute.xlu0 %916
    %918 = vrot.lane.b32.xlu0 %v896, 32
    %v919 = vpop.permute.xlu0 %918
    %920 = vrot.lane.b32.xlu0 %v897, 32
    %v921 = vpop.permute.xlu0 %920
    %930 = vst.msk [vmem:[#allocation3] sm:$0xf] %vm334, %v907
    %931 = vst.msk [vmem:[#allocation3 + $0x4] sm:$0xf] %vm334, %v909
    %932 = vst.msk [vmem:[#allocation3 + $0x8] sm:$0xf] %vm334, %v911
    %933 = vst.msk [vmem:[#allocation3 + $0xc] sm:$0xf] %vm334, %v913
    %934 = vst.msk [vmem:[#allocation3 + $0x10] sm:$0xf] %vm334, %v915
    %935 = vst.msk [vmem:[#allocation3 + $0x14] sm:$0xf] %vm334, %v917
    %936 = vst.msk [vmem:[#allocation3 + $0x18] sm:$0xf] %vm334, %v919
    %937 = vst.msk [vmem:[#allocation3 + $0x1c] sm:$0xf] %vm334, %v921
    %v938 = vld [vmem:[%s184] sm:$0xf]
    %v939 = vld [vmem:[%s184 + $0x8] sm:$0xf]
    %v940 = vld [vmem:[%s184 + $0x10] sm:$0xf]
    %v941 = vld [vmem:[%s184 + $0x18] sm:$0xf]
    %v942 = vld [vmem:[%s184 + $0x30] sm:$0xf]
    %v943 = vld [vmem:[%s184 + $0x38] sm:$0xf]
    %v944 = vld [vmem:[%s184 + $0x40] sm:$0xf]
    %v945 = vld [vmem:[%s184 + $0x48] sm:$0xf]
    %954 = vrot.lane.b32.xlu0 %v938, 64
    %v955 = vpop.permute.xlu0 %954
    %956 = vrot.lane.b32.xlu0 %v939, 64
    %v957 = vpop.permute.xlu0 %956
    %958 = vrot.lane.b32.xlu0 %v940, 64
    %v959 = vpop.permute.xlu0 %958
    %960 = vrot.lane.b32.xlu0 %v941, 64
    %v961 = vpop.permute.xlu0 %960
    %962 = vrot.lane.b32.xlu0 %v942, 64
    %v963 = vpop.permute.xlu0 %962
    %964 = vrot.lane.b32.xlu0 %v943, 64
    %v965 = vpop.permute.xlu0 %964
    %966 = vrot.lane.b32.xlu0 %v944, 64
    %v967 = vpop.permute.xlu0 %966
    %968 = vrot.lane.b32.xlu0 %v945, 64
    %v969 = vpop.permute.xlu0 %968
    %978 = vst.msk [vmem:[#allocation3] sm:$0xf] %vm383, %v955
    %979 = vst.msk [vmem:[#allocation3 + $0x4] sm:$0xf] %vm383, %v957
    %980 = vst.msk [vmem:[#allocation3 + $0x8] sm:$0xf] %vm383, %v959
    %981 = vst.msk [vmem:[#allocation3 + $0xc] sm:$0xf] %vm383, %v961
    %982 = vst.msk [vmem:[#allocation3 + $0x10] sm:$0xf] %vm383, %v963
    %983 = vst.msk [vmem:[#allocation3 + $0x14] sm:$0xf] %vm383, %v965
    %984 = vst.msk [vmem:[#allocation3 + $0x18] sm:$0xf] %vm383, %v967
    %985 = vst.msk [vmem:[#allocation3 + $0x1c] sm:$0xf] %vm383, %v969
    %v986 = vld [vmem:[%s184 + $0x1] sm:$0xf]
    %v987 = vld [vmem:[%s184 + $0x9] sm:$0xf]
    %v988 = vld [vmem:[%s184 + $0x11] sm:$0xf]
    %v989 = vld [vmem:[%s184 + $0x19] sm:$0xf]
    %v990 = vld [vmem:[%s184 + $0x31] sm:$0xf]
    %v991 = vld [vmem:[%s184 + $0x39] sm:$0xf]
    %v992 = vld [vmem:[%s184 + $0x41] sm:$0xf]
    %v993 = vld [vmem:[%s184 + $0x49] sm:$0xf]
    %1002 = vrot.lane.b32.xlu0 %v986, 96
    %v1003 = vpop.permute.xlu0 %1002
    %1004 = vrot.lane.b32.xlu0 %v987, 96
    %v1005 = vpop.permute.xlu0 %1004
    %1006 = vrot.lane.b32.xlu0 %v988, 96
    %v1007 = vpop.permute.xlu0 %1006
    %1008 = vrot.lane.b32.xlu0 %v989, 96
    %v1009 = vpop.permute.xlu0 %1008
    %1010 = vrot.lane.b32.xlu0 %v990, 96
    %v1011 = vpop.permute.xlu0 %1010
    %1012 = vrot.lane.b32.xlu0 %v991, 96
    %v1013 = vpop.permute.xlu0 %1012
    %1014 = vrot.lane.b32.xlu0 %v992, 96
    %v1015 = vpop.permute.xlu0 %1014
    %1016 = vrot.lane.b32.xlu0 %v993, 96
    %v1017 = vpop.permute.xlu0 %1016
    %1026 = vst.msk [vmem:[#allocation3] sm:$0xf] %vm432, %v1003
    %1027 = vst.msk [vmem:[#allocation3 + $0x4] sm:$0xf] %vm432, %v1005
    %1028 = vst.msk [vmem:[#allocation3 + $0x8] sm:$0xf] %vm432, %v1007
    %1029 = vst.msk [vmem:[#allocation3 + $0xc] sm:$0xf] %vm432, %v1009
    %1030 = vst.msk [vmem:[#allocation3 + $0x10] sm:$0xf] %vm432, %v1011
    %1031 = vst.msk [vmem:[#allocation3 + $0x14] sm:$0xf] %vm432, %v1013
    %1032 = vst.msk [vmem:[#allocation3 + $0x18] sm:$0xf] %vm432, %v1015
    %1033 = vst.msk [vmem:[#allocation3 + $0x1c] sm:$0xf] %vm432, %v1017
    %v1034 = vld [vmem:[#allocation3] sm:$0xf]
    %v1035 = vld [vmem:[#allocation3 + $0x4] sm:$0xf]
    %v1036 = vld [vmem:[#allocation3 + $0x8] sm:$0xf]
    %v1037 = vld [vmem:[#allocation3 + $0xc] sm:$0xf]
    %v1038 = vld [vmem:[#allocation3 + $0x10] sm:$0xf]
    %v1039 = vld [vmem:[#allocation3 + $0x14] sm:$0xf]
    %v1040 = vld [vmem:[#allocation3 + $0x18] sm:$0xf]
    %v1041 = vld [vmem:[#allocation3 + $0x1c] sm:$0xf]
    %1050 = vst [vmem:[#allocation1] ss:$2 sm:$0xff] %v1034
    %s1051 = scalar_lea.vmem [#allocation1], 1
    %1052 = vst [vmem:[%s1051] ss:$2 sm:$0xff] %v1035
    %s1053 = scalar_lea.vmem [#allocation1], 16
    %1054 = vst [vmem:[%s1053] ss:$2 sm:$0xff] %v1036
    %s1055 = scalar_lea.vmem [#allocation1], 17
    %1056 = vst [vmem:[%s1055] ss:$2 sm:$0xff] %v1037
    %s1057 = scalar_lea.vmem [#allocation1], 32
    %1058 = vst [vmem:[%s1057] ss:$2 sm:$0xff] %v1038
    %s1059 = scalar_lea.vmem [#allocation1], 33
    %1060 = vst [vmem:[%s1059] ss:$2 sm:$0xff] %v1039
    %s1061 = scalar_lea.vmem [#allocation1], 48
    %1062 = vst [vmem:[%s1061] ss:$2 sm:$0xff] %v1040
    %s1063 = scalar_lea.vmem [#allocation1], 49
    %1064 = vst [vmem:[%s1063] ss:$2 sm:$0xff] %v1041
    %v1065 = vld.sshfl [vmem:[#allocation1] sm:$0xff pattern:$0x75316420]
    %v1066 = vld.sshfl [vmem:[#allocation1 + $0x10] sm:$0xff pattern:$0x75316420]
    %v1067 = vld.sshfl [vmem:[#allocation1 + $0x20] sm:$0xff pattern:$0x75316420]
    %v1068 = vld.sshfl [vmem:[#allocation1 + $0x30] sm:$0xff pattern:$0x75316420]
    %v1073 = vpack.c.bf16 %v1066, %v1065
    %v1074 = vpack.c.bf16 %v1068, %v1067
    %s1075 = scalar_lea.vmem %s3, 128
    %v1076 = vld [vmem:[%s1075] sm:$0xf]
    %v1077 = vld [vmem:[%s1075 + $0x4] sm:$0xf]
    %v1078 = vld [vmem:[%s1075 + $0x8] sm:$0xf]
    %v1079 = vld [vmem:[%s1075 + $0xc] sm:$0xf]
    %v1080 = vld [vmem:[%s1075 + $0x10] sm:$0xf]
    %v1081 = vld [vmem:[%s1075 + $0x14] sm:$0xf]
    %v1082 = vld [vmem:[%s1075 + $0x18] sm:$0xf]
    %v1083 = vld [vmem:[%s1075 + $0x1c] sm:$0xf]
    %v1084 = vld [vmem:[%s1075 + $0x20] sm:$0xf]
    %v1085 = vld [vmem:[%s1075 + $0x24] sm:$0xf]
    %v1086 = vld [vmem:[%s1075 + $0x28] sm:$0xf]
    %v1087 = vld [vmem:[%s1075 + $0x2c] sm:$0xf]
    %v1088 = vld [vmem:[%s1075 + $0x30] sm:$0xf]
    %v1089 = vld [vmem:[%s1075 + $0x34] sm:$0xf]
    %v1090 = vld [vmem:[%s1075 + $0x38] sm:$0xf]
    %v1091 = vld [vmem:[%s1075 + $0x3c] sm:$0xf]
    %v1108 = vunpack.c.l.b16 %v1076
    %v1109 = vunpack.c.l.b16 %v1077
    %v1110 = vunpack.c.l.b16 %v1078
    %v1111 = vunpack.c.l.b16 %v1079
    %v1112 = vunpack.c.l.b16 %v1080
    %v1113 = vunpack.c.l.b16 %v1081
    %v1114 = vunpack.c.l.b16 %v1082
    %v1115 = vunpack.c.l.b16 %v1083
    %v1116 = vunpack.c.l.b16 %v1084
    %v1117 = vunpack.c.l.b16 %v1085
    %v1118 = vunpack.c.l.b16 %v1086
    %v1119 = vunpack.c.l.b16 %v1087
    %v1120 = vunpack.c.l.b16 %v1088
    %v1121 = vunpack.c.l.b16 %v1089
    %v1122 = vunpack.c.l.b16 %v1090
    %v1123 = vunpack.c.l.b16 %v1091
    %v1124 = vpack.c.b16 %v1109, %v1108
    %v1125 = vpack.c.b16 %v1111, %v1110
    %v1126 = vpack.c.b16 %v1113, %v1112
    %v1127 = vpack.c.b16 %v1115, %v1114
    %v1128 = vpack.c.b16 %v1117, %v1116
    %v1129 = vpack.c.b16 %v1119, %v1118
    %v1130 = vpack.c.b16 %v1121, %v1120
    %v1131 = vpack.c.b16 %v1123, %v1122
    %1140 = vmatpush.bf16.msra.mxu0 %v1131
    %1141 = vmatpush.bf16.msra.mxu0 %v1130
    %1142 = vmatpush.bf16.msra.mxu0 %v1129
    %1143 = vmatpush.bf16.msra.mxu0 %v1128
    %1144 = vmatpush.bf16.msra.mxu0 %v1127
    %1145 = vmatpush.bf16.msra.mxu0 %v1126
    %1146 = vmatpush.bf16.msra.mxu0 %v1125
    %1147 = vmatpush.bf16.msra.mxu0 %v1124
    %1148 = vmatmul.bf16.gmra.mxu0 %v1073
    %v1149 = vpop.f32.mrf.mxu0
    %v1150 = vadd.f32 0.0, %v1149
    %v1151 = vpop.f32.mrf.mxu0
    %v1152 = vadd.f32 0.0, %v1151
    %1153 = vmatmul.bf16.gmra.mxu0 %v1074
    %v1154 = vpop.f32.mrf.mxu0
    %v1155 = vadd.f32 0.0, %v1154
    %v1156 = vpop.f32.mrf.mxu0
    %v1157 = vadd.f32 0.0, %v1156
    %1158 = vdwg.mxu0
    %v1163 = vrot.slane %v1150, 4
    %v1164 = vrot.slane %v1152, 4
    %v1165 = vrot.slane %v1155, 4
    %v1166 = vrot.slane %v1157, 4
    %v1171 = vld [vmem:[%s151 + $0x1] sm:$0xf]
    %v1172 = vld [vmem:[%s151 + $0x9] sm:$0xf]
    %v1173 = vld [vmem:[%s151 + $0x11] sm:$0xf]
    %v1174 = vld [vmem:[%s151 + $0x19] sm:$0xf]
    %v1175 = vld [vmem:[%s151 + $0x31] sm:$0xf]
    %v1176 = vld [vmem:[%s151 + $0x39] sm:$0xf]
    %v1177 = vld [vmem:[%s151 + $0x41] sm:$0xf]
    %v1178 = vld [vmem:[%s151 + $0x49] sm:$0xf]
    %1179 = vst.msk [vmem:[#allocation3] sm:$0xf] %vm285, %v1171
    %1180 = vst.msk [vmem:[#allocation3 + $0x4] sm:$0xf] %vm285, %v1172
    %1181 = vst.msk [vmem:[#allocation3 + $0x8] sm:$0xf] %vm285, %v1173
    %1182 = vst.msk [vmem:[#allocation3 + $0xc] sm:$0xf] %vm285, %v1174
    %1183 = vst.msk [vmem:[#allocation3 + $0x10] sm:$0xf] %vm285, %v1175
    %1184 = vst.msk [vmem:[#allocation3 + $0x14] sm:$0xf] %vm285, %v1176
    %1185 = vst.msk [vmem:[#allocation3 + $0x18] sm:$0xf] %vm285, %v1177
    %1186 = vst.msk [vmem:[#allocation3 + $0x1c] sm:$0xf] %vm285, %v1178
    %v1187 = vld [vmem:[%s151 + $0x2] sm:$0xf]
    %v1188 = vld [vmem:[%s151 + $0xa] sm:$0xf]
    %v1189 = vld [vmem:[%s151 + $0x12] sm:$0xf]
    %v1190 = vld [vmem:[%s151 + $0x1a] sm:$0xf]
    %v1191 = vld [vmem:[%s151 + $0x32] sm:$0xf]
    %v1192 = vld [vmem:[%s151 + $0x3a] sm:$0xf]
    %v1193 = vld [vmem:[%s151 + $0x42] sm:$0xf]
    %v1194 = vld [vmem:[%s151 + $0x4a] sm:$0xf]
    %1203 = vrot.lane.b32.xlu0 %v1187, 32
    %v1204 = vpop.permute.xlu0 %1203
    %1205 = vrot.lane.b32.xlu0 %v1188, 32
    %v1206 = vpop.permute.xlu0 %1205
    %1207 = vrot.lane.b32.xlu0 %v1189, 32
    %v1208 = vpop.permute.xlu0 %1207
    %1209 = vrot.lane.b32.xlu0 %v1190, 32
    %v1210 = vpop.permute.xlu0 %1209
    %1211 = vrot.lane.b32.xlu0 %v1191, 32
    %v1212 = vpop.permute.xlu0 %1211
    %1213 = vrot.lane.b32.xlu0 %v1192, 32
    %v1214 = vpop.permute.xlu0 %1213
    %1215 = vrot.lane.b32.xlu0 %v1193, 32
    %v1216 = vpop.permute.xlu0 %1215
    %1217 = vrot.lane.b32.xlu0 %v1194, 32
    %v1218 = vpop.permute.xlu0 %1217
    %1227 = vst.msk [vmem:[#allocation3] sm:$0xf] %vm334, %v1204
    %1228 = vst.msk [vmem:[#allocation3 + $0x4] sm:$0xf] %vm334, %v1206
    %1229 = vst.msk [vmem:[#allocation3 + $0x8] sm:$0xf] %vm334, %v1208
    %1230 = vst.msk [vmem:[#allocation3 + $0xc] sm:$0xf] %vm334, %v1210
    %1231 = vst.msk [vmem:[#allocation3 + $0x10] sm:$0xf] %vm334, %v1212
    %1232 = vst.msk [vmem:[#allocation3 + $0x14] sm:$0xf] %vm334, %v1214
    %1233 = vst.msk [vmem:[#allocation3 + $0x18] sm:$0xf] %vm334, %v1216
    %1234 = vst.msk [vmem:[#allocation3 + $0x1c] sm:$0xf] %vm334, %v1218
    %v1235 = vld [vmem:[%s184 + $0x1] sm:$0xf]
    %v1236 = vld [vmem:[%s184 + $0x9] sm:$0xf]
    %v1237 = vld [vmem:[%s184 + $0x11] sm:$0xf]
    %v1238 = vld [vmem:[%s184 + $0x19] sm:$0xf]
    %v1239 = vld [vmem:[%s184 + $0x31] sm:$0xf]
    %v1240 = vld [vmem:[%s184 + $0x39] sm:$0xf]
    %v1241 = vld [vmem:[%s184 + $0x41] sm:$0xf]
    %v1242 = vld [vmem:[%s184 + $0x49] sm:$0xf]
    %1251 = vrot.lane.b32.xlu0 %v1235, 64
    %v1252 = vpop.permute.xlu0 %1251
    %1253 = vrot.lane.b32.xlu0 %v1236, 64
    %v1254 = vpop.permute.xlu0 %1253
    %1255 = vrot.lane.b32.xlu0 %v1237, 64
    %v1256 = vpop.permute.xlu0 %1255
    %1257 = vrot.lane.b32.xlu0 %v1238, 64
    %v1258 = vpop.permute.xlu0 %1257
    %1259 = vrot.lane.b32.xlu0 %v1239, 64
    %v1260 = vpop.permute.xlu0 %1259
    %1261 = vrot.lane.b32.xlu0 %v1240, 64
    %v1262 = vpop.permute.xlu0 %1261
    %1263 = vrot.lane.b32.xlu0 %v1241, 64
    %v1264 = vpop.permute.xlu0 %1263
    %1265 = vrot.lane.b32.xlu0 %v1242, 64
    %v1266 = vpop.permute.xlu0 %1265
    %1275 = vst.msk [vmem:[#allocation3] sm:$0xf] %vm383, %v1252
    %1276 = vst.msk [vmem:[#allocation3 + $0x4] sm:$0xf] %vm383, %v1254
    %1277 = vst.msk [vmem:[#allocation3 + $0x8] sm:$0xf] %vm383, %v1256
    %1278 = vst.msk [vmem:[#allocation3 + $0xc] sm:$0xf] %vm383, %v1258
    %1279 = vst.msk [vmem:[#allocation3 + $0x10] sm:$0xf] %vm383, %v1260
    %1280 = vst.msk [vmem:[#allocation3 + $0x14] sm:$0xf] %vm383, %v1262
    %1281 = vst.msk [vmem:[#allocation3 + $0x18] sm:$0xf] %vm383, %v1264
    %1282 = vst.msk [vmem:[#allocation3 + $0x1c] sm:$0xf] %vm383, %v1266
    %v1283 = vld [vmem:[%s184 + $0x2] sm:$0xf]
    %v1284 = vld [vmem:[%s184 + $0xa] sm:$0xf]
    %v1285 = vld [vmem:[%s184 + $0x12] sm:$0xf]
    %v1286 = vld [vmem:[%s184 + $0x1a] sm:$0xf]
    %v1287 = vld [vmem:[%s184 + $0x32] sm:$0xf]
    %v1288 = vld [vmem:[%s184 + $0x3a] sm:$0xf]
    %v1289 = vld [vmem:[%s184 + $0x42] sm:$0xf]
    %v1290 = vld [vmem:[%s184 + $0x4a] sm:$0xf]
    %1299 = vrot.lane.b32.xlu0 %v1283, 96
    %v1300 = vpop.permute.xlu0 %1299
    %1301 = vrot.lane.b32.xlu0 %v1284, 96
    %v1302 = vpop.permute.xlu0 %1301
    %1303 = vrot.lane.b32.xlu0 %v1285, 96
    %v1304 = vpop.permute.xlu0 %1303
    %1305 = vrot.lane.b32.xlu0 %v1286, 96
    %v1306 = vpop.permute.xlu0 %1305
    %1307 = vrot.lane.b32.xlu0 %v1287, 96
    %v1308 = vpop.permute.xlu0 %1307
    %1309 = vrot.lane.b32.xlu0 %v1288, 96
    %v1310 = vpop.permute.xlu0 %1309
    %1311 = vrot.lane.b32.xlu0 %v1289, 96
    %v1312 = vpop.permute.xlu0 %1311
    %1313 = vrot.lane.b32.xlu0 %v1290, 96
    %v1314 = vpop.permute.xlu0 %1313
    %1323 = vst.msk [vmem:[#allocation3] sm:$0xf] %vm432, %v1300
    %1324 = vst.msk [vmem:[#allocation3 + $0x4] sm:$0xf] %vm432, %v1302
    %1325 = vst.msk [vmem:[#allocation3 + $0x8] sm:$0xf] %vm432, %v1304
    %1326 = vst.msk [vmem:[#allocation3 + $0xc] sm:$0xf] %vm432, %v1306
    %1327 = vst.msk [vmem:[#allocation3 + $0x10] sm:$0xf] %vm432, %v1308
    %1328 = vst.msk [vmem:[#allocation3 + $0x14] sm:$0xf] %vm432, %v1310
    %1329 = vst.msk [vmem:[#allocation3 + $0x18] sm:$0xf] %vm432, %v1312
    %1330 = vst.msk [vmem:[#allocation3 + $0x1c] sm:$0xf] %vm432, %v1314
    %v1331 = vld [vmem:[#allocation3] sm:$0xf]
    %v1332 = vld [vmem:[#allocation3 + $0x4] sm:$0xf]
    %v1333 = vld [vmem:[#allocation3 + $0x8] sm:$0xf]
    %v1334 = vld [vmem:[#allocation3 + $0xc] sm:$0xf]
    %v1335 = vld [vmem:[#allocation3 + $0x10] sm:$0xf]
    %v1336 = vld [vmem:[#allocation3 + $0x14] sm:$0xf]
    %v1337 = vld [vmem:[#allocation3 + $0x18] sm:$0xf]
    %v1338 = vld [vmem:[#allocation3 + $0x1c] sm:$0xf]
    %1347 = vst [vmem:[#allocation1] ss:$2 sm:$0xff] %v1331
    %s1348 = scalar_lea.vmem [#allocation1], 1
    %1349 = vst [vmem:[%s1348] ss:$2 sm:$0xff] %v1332
    %s1350 = scalar_lea.vmem [#allocation1], 16
    %1351 = vst [vmem:[%s1350] ss:$2 sm:$0xff] %v1333
    %s1352 = scalar_lea.vmem [#allocation1], 17
    %1353 = vst [vmem:[%s1352] ss:$2 sm:$0xff] %v1334
    %s1354 = scalar_lea.vmem [#allocation1], 32
    %1355 = vst [vmem:[%s1354] ss:$2 sm:$0xff] %v1335
    %s1356 = scalar_lea.vmem [#allocation1], 33
    %1357 = vst [vmem:[%s1356] ss:$2 sm:$0xff] %v1336
    %s1358 = scalar_lea.vmem [#allocation1], 48
    %1359 = vst [vmem:[%s1358] ss:$2 sm:$0xff] %v1337
    %s1360 = scalar_lea.vmem [#allocation1], 49
    %1361 = vst [vmem:[%s1360] ss:$2 sm:$0xff] %v1338
    %v1362 = vld.sshfl [vmem:[#allocation1] sm:$0xff pattern:$0x75316420]
    %v1363 = vld.sshfl [vmem:[#allocation1 + $0x10] sm:$0xff pattern:$0x75316420]
    %v1364 = vld.sshfl [vmem:[#allocation1 + $0x20] sm:$0xff pattern:$0x75316420]
    %v1365 = vld.sshfl [vmem:[#allocation1 + $0x30] sm:$0xff pattern:$0x75316420]
    %v1370 = vpack.c.bf16 %v1363, %v1362
    %v1371 = vpack.c.bf16 %v1365, %v1364
    %s1372 = scalar_lea.vmem %s3, 192
    %v1373 = vld [vmem:[%s1372] sm:$0xf]
    %v1374 = vld [vmem:[%s1372 + $0x4] sm:$0xf]
    %v1375 = vld [vmem:[%s1372 + $0x8] sm:$0xf]
    %v1376 = vld [vmem:[%s1372 + $0xc] sm:$0xf]
    %v1377 = vld [vmem:[%s1372 + $0x10] sm:$0xf]
    %v1378 = vld [vmem:[%s1372 + $0x14] sm:$0xf]
    %v1379 = vld [vmem:[%s1372 + $0x18] sm:$0xf]
    %v1380 = vld [vmem:[%s1372 + $0x1c] sm:$0xf]
    %v1381 = vld [vmem:[%s1372 + $0x20] sm:$0xf]
    %v1382 = vld [vmem:[%s1372 + $0x24] sm:$0xf]
    %v1383 = vld [vmem:[%s1372 + $0x28] sm:$0xf]
    %v1384 = vld [vmem:[%s1372 + $0x2c] sm:$0xf]
    %v1385 = vld [vmem:[%s1372 + $0x30] sm:$0xf]
    %v1386 = vld [vmem:[%s1372 + $0x34] sm:$0xf]
    %v1387 = vld [vmem:[%s1372 + $0x38] sm:$0xf]
    %v1388 = vld [vmem:[%s1372 + $0x3c] sm:$0xf]
    %v1405 = vunpack.c.l.b16 %v1373
    %v1406 = vunpack.c.l.b16 %v1374
    %v1407 = vunpack.c.l.b16 %v1375
    %v1408 = vunpack.c.l.b16 %v1376
    %v1409 = vunpack.c.l.b16 %v1377
    %v1410 = vunpack.c.l.b16 %v1378
    %v1411 = vunpack.c.l.b16 %v1379
    %v1412 = vunpack.c.l.b16 %v1380
    %v1413 = vunpack.c.l.b16 %v1381
    %v1414 = vunpack.c.l.b16 %v1382
    %v1415 = vunpack.c.l.b16 %v1383
    %v1416 = vunpack.c.l.b16 %v1384
    %v1417 = vunpack.c.l.b16 %v1385
    %v1418 = vunpack.c.l.b16 %v1386
    %v1419 = vunpack.c.l.b16 %v1387
    %v1420 = vunpack.c.l.b16 %v1388
    %v1421 = vpack.c.b16 %v1406, %v1405
    %v1422 = vpack.c.b16 %v1408, %v1407
    %v1423 = vpack.c.b16 %v1410, %v1409
    %v1424 = vpack.c.b16 %v1412, %v1411
    %v1425 = vpack.c.b16 %v1414, %v1413
    %v1426 = vpack.c.b16 %v1416, %v1415
    %v1427 = vpack.c.b16 %v1418, %v1417
    %v1428 = vpack.c.b16 %v1420, %v1419
    %1437 = vmatpush.bf16.msra.mxu0 %v1428
    %1438 = vmatpush.bf16.msra.mxu0 %v1427
    %1439 = vmatpush.bf16.msra.mxu0 %v1426
    %1440 = vmatpush.bf16.msra.mxu0 %v1425
    %1441 = vmatpush.bf16.msra.mxu0 %v1424
    %1442 = vmatpush.bf16.msra.mxu0 %v1423
    %1443 = vmatpush.bf16.msra.mxu0 %v1422
    %1444 = vmatpush.bf16.msra.mxu0 %v1421
    %1445 = vmatmul.bf16.gmra.mxu0 %v1370
    %v1446 = vpop.f32.mrf.mxu0
    %v1447 = vadd.f32 0.0, %v1446
    %v1448 = vpop.f32.mrf.mxu0
    %v1449 = vadd.f32 0.0, %v1448
    %1450 = vmatmul.bf16.gmra.mxu0 %v1371
    %v1451 = vpop.f32.mrf.mxu0
    %v1452 = vadd.f32 0.0, %v1451
    %v1453 = vpop.f32.mrf.mxu0
    %v1454 = vadd.f32 0.0, %v1453
    %1455 = vdwg.mxu0
    %v1460 = vrot.slane %v1447, 4
    %v1461 = vrot.slane %v1449, 4
    %v1462 = vrot.slane %v1452, 4
    %v1463 = vrot.slane %v1454, 4
    %vm1468 = vcmask 125952
    %v1469 = vsel %vm1468, %v556, 0.0
    %v1470 = vsel %vm1468, %v569, 0.0
    %v1471 = vadd.f32 %v1469, %v1470
    %v1472 = vsel %vm1468, %v558, 0.0
    %v1473 = vadd.f32 %v1471, %v1472
    %v1474 = vsel %vm1468, %v570, 0.0
    %v1475 = vadd.f32 %v1473, %v1474
    %v1476 = vsel %vm1468, %v561, 0.0
    %v1477 = vadd.f32 %v1475, %v1476
    %v1478 = vsel %vm1468, %v571, 0.0
    %v1479 = vadd.f32 %v1477, %v1478
    %v1480 = vsel %vm1468, %v563, 0.0
    %v1481 = vadd.f32 %v1479, %v1480
    %v1482 = vsel %vm1468, %v572, 0.0
    %v1483 = vadd.f32 %v1481, %v1482
    %v1484 = vrot.slane %v1483, 4
    %v1485 = vadd.f32 %v1483, %v1484
    %v1486 = vrot.slane %v1485, 2
    %v1487 = vadd.f32 %v1485, %v1486
    %v1488 = vrot.slane %v1487, 1
    %v1489 = vadd.f32 %v1487, %v1488
    %v1490 = vmul.f32 %v556, %v556
    %v1491 = vmul.f32 %v569, %v569
    %v1492 = vmul.f32 %v558, %v558
    %v1493 = vmul.f32 %v570, %v570
    %v1494 = vmul.f32 %v561, %v561
    %v1495 = vmul.f32 %v571, %v571
    %v1496 = vmul.f32 %v563, %v563
    %v1497 = vmul.f32 %v572, %v572
    %v1498 = vsel %vm1468, %v1490, 0.0
    %v1499 = vsel %vm1468, %v1491, 0.0
    %v1500 = vadd.f32 %v1498, %v1499
    %v1501 = vsel %vm1468, %v1492, 0.0
    %v1502 = vadd.f32 %v1500, %v1501
    %v1503 = vsel %vm1468, %v1493, 0.0
    %v1504 = vadd.f32 %v1502, %v1503
    %v1505 = vsel %vm1468, %v1494, 0.0
    %v1506 = vadd.f32 %v1504, %v1505
    %v1507 = vsel %vm1468, %v1495, 0.0
    %v1508 = vadd.f32 %v1506, %v1507
    %v1509 = vsel %vm1468, %v1496, 0.0
    %v1510 = vadd.f32 %v1508, %v1509
    %v1511 = vsel %vm1468, %v1497, 0.0
    %v1512 = vadd.f32 %v1510, %v1511
    %v1513 = vrot.slane %v1512, 4
    %v1514 = vadd.f32 %v1512, %v1513
    %v1515 = vrot.slane %v1514, 2
    %v1516 = vadd.f32 %v1514, %v1515
    %v1517 = vrot.slane %v1516, 1
    %v1518 = vadd.f32 %v1516, %v1517
    %v1519 = vsel %vm1468, %v853, 0.0
    %v1520 = vsel %vm1468, %v866, 0.0
    %v1521 = vadd.f32 %v1519, %v1520
    %v1522 = vsel %vm1468, %v855, 0.0
    %v1523 = vadd.f32 %v1521, %v1522
    %v1524 = vsel %vm1468, %v867, 0.0
    %v1525 = vadd.f32 %v1523, %v1524
    %v1526 = vsel %vm1468, %v858, 0.0
    %v1527 = vadd.f32 %v1525, %v1526
    %v1528 = vsel %vm1468, %v868, 0.0
    %v1529 = vadd.f32 %v1527, %v1528
    %v1530 = vsel %vm1468, %v860, 0.0
    %v1531 = vadd.f32 %v1529, %v1530
    %v1532 = vsel %vm1468, %v869, 0.0
    %v1533 = vadd.f32 %v1531, %v1532
    %v1534 = vrot.slane %v1533, 4
    %v1535 = vadd.f32 %v1533, %v1534
    %v1536 = vrot.slane %v1535, 2
    %v1537 = vadd.f32 %v1535, %v1536
    %v1538 = vrot.slane %v1537, 1
    %v1539 = vadd.f32 %v1537, %v1538
    %v1540 = vmul.f32 %v853, %v853
    %v1541 = vmul.f32 %v866, %v866
    %v1542 = vmul.f32 %v855, %v855
    %v1543 = vmul.f32 %v867, %v867
    %v1544 = vmul.f32 %v858, %v858
    %v1545 = vmul.f32 %v868, %v868
    %v1546 = vmul.f32 %v860, %v860
    %v1547 = vmul.f32 %v869, %v869
    %v1548 = vsel %vm1468, %v1540, 0.0
    %v1549 = vsel %vm1468, %v1541, 0.0
    %v1550 = vadd.f32 %v1548, %v1549
    %v1551 = vsel %vm1468, %v1542, 0.0
    %v1552 = vadd.f32 %v1550, %v1551
    %v1553 = vsel %vm1468, %v1543, 0.0
    %v1554 = vadd.f32 %v1552, %v1553
    %v1555 = vsel %vm1468, %v1544, 0.0
    %v1556 = vadd.f32 %v1554, %v1555
    %v1557 = vsel %vm1468, %v1545, 0.0
    %v1558 = vadd.f32 %v1556, %v1557
    %v1559 = vsel %vm1468, %v1546, 0.0
    %v1560 = vadd.f32 %v1558, %v1559
    %v1561 = vsel %vm1468, %v1547, 0.0
    %v1562 = vadd.f32 %v1560, %v1561
    %v1563 = vrot.slane %v1562, 4
    %v1564 = vadd.f32 %v1562, %v1563
    %v1565 = vrot.slane %v1564, 2
    %v1566 = vadd.f32 %v1564, %v1565
    %v1567 = vrot.slane %v1566, 1
    %v1568 = vadd.f32 %v1566, %v1567
    %v1569 = vadd.f32 %v1489, %v1539
    %v1570 = vadd.f32 %v1518, %v1568
    %v1571 = vsel %vm1468, %v1150, 0.0
    %v1572 = vsel %vm1468, %v1163, 0.0
    %v1573 = vadd.f32 %v1571, %v1572
    %v1574 = vsel %vm1468, %v1152, 0.0
    %v1575 = vadd.f32 %v1573, %v1574
    %v1576 = vsel %vm1468, %v1164, 0.0
    %v1577 = vadd.f32 %v1575, %v1576
    %v1578 = vsel %vm1468, %v1155, 0.0
    %v1579 = vadd.f32 %v1577, %v1578
    %v1580 = vsel %vm1468, %v1165, 0.0
    %v1581 = vadd.f32 %v1579, %v1580
    %v1582 = vsel %vm1468, %v1157, 0.0
    %v1583 = vadd.f32 %v1581, %v1582
    %v1584 = vsel %vm1468, %v1166, 0.0
    %v1585 = vadd.f32 %v1583, %v1584
    %v1586 = vrot.slane %v1585, 4
    %v1587 = vadd.f32 %v1585, %v1586
    %v1588 = vrot.slane %v1587, 2
    %v1589 = vadd.f32 %v1587, %v1588
    %v1590 = vrot.slane %v1589, 1
    %v1591 = vadd.f32 %v1589, %v1590
    %v1592 = vmul.f32 %v1150, %v1150
    %v1593 = vmul.f32 %v1163, %v1163
    %v1594 = vmul.f32 %v1152, %v1152
    %v1595 = vmul.f32 %v1164, %v1164
    %v1596 = vmul.f32 %v1155, %v1155
    %v1597 = vmul.f32 %v1165, %v1165
    %v1598 = vmul.f32 %v1157, %v1157
    %v1599 = vmul.f32 %v1166, %v1166
    %v1600 = vsel %vm1468, %v1592, 0.0
    %v1601 = vsel %vm1468, %v1593, 0.0
    %v1602 = vadd.f32 %v1600, %v1601
    %v1603 = vsel %vm1468, %v1594, 0.0
    %v1604 = vadd.f32 %v1602, %v1603
    %v1605 = vsel %vm1468, %v1595, 0.0
    %v1606 = vadd.f32 %v1604, %v1605
    %v1607 = vsel %vm1468, %v1596, 0.0
    %v1608 = vadd.f32 %v1606, %v1607
    %v1609 = vsel %vm1468, %v1597, 0.0
    %v1610 = vadd.f32 %v1608, %v1609
    %v1611 = vsel %vm1468, %v1598, 0.0
    %v1612 = vadd.f32 %v1610, %v1611
    %v1613 = vsel %vm1468, %v1599, 0.0
    %v1614 = vadd.f32 %v1612, %v1613
    %v1615 = vrot.slane %v1614, 4
    %v1616 = vadd.f32 %v1614, %v1615
    %v1617 = vrot.slane %v1616, 2
    %v1618 = vadd.f32 %v1616, %v1617
    %v1619 = vrot.slane %v1618, 1
    %v1620 = vadd.f32 %v1618, %v1619
    %v1621 = vadd.f32 %v1569, %v1591
    %v1622 = vadd.f32 %v1570, %v1620
    %v1623 = vsel %vm1468, %v1447, 0.0
    %v1624 = vsel %vm1468, %v1460, 0.0
    %v1625 = vadd.f32 %v1623, %v1624
    %v1626 = vsel %vm1468, %v1449, 0.0
    %v1627 = vadd.f32 %v1625, %v1626
    %v1628 = vsel %vm1468, %v1461, 0.0
    %v1629 = vadd.f32 %v1627, %v1628
    %v1630 = vsel %vm1468, %v1452, 0.0
    %v1631 = vadd.f32 %v1629, %v1630
    %v1632 = vsel %vm1468, %v1462, 0.0
    %v1633 = vadd.f32 %v1631, %v1632
    %v1634 = vsel %vm1468, %v1454, 0.0
    %v1635 = vadd.f32 %v1633, %v1634
    %v1636 = vsel %vm1468, %v1463, 0.0
    %v1637 = vadd.f32 %v1635, %v1636
    %v1638 = vrot.slane %v1637, 4
    %v1639 = vadd.f32 %v1637, %v1638
    %v1640 = vrot.slane %v1639, 2
    %v1641 = vadd.f32 %v1639, %v1640
    %v1642 = vrot.slane %v1641, 1
    %v1643 = vadd.f32 %v1641, %v1642
    %v1644 = vmul.f32 %v1447, %v1447
    %v1645 = vmul.f32 %v1460, %v1460
    %v1646 = vmul.f32 %v1449, %v1449
    %v1647 = vmul.f32 %v1461, %v1461
    %v1648 = vmul.f32 %v1452, %v1452
    %v1649 = vmul.f32 %v1462, %v1462
    %v1650 = vmul.f32 %v1454, %v1454
    %v1651 = vmul.f32 %v1463, %v1463
    %v1652 = vsel %vm1468, %v1644, 0.0
    %v1653 = vsel %vm1468, %v1645, 0.0
    %v1654 = vadd.f32 %v1652, %v1653
    %v1655 = vsel %vm1468, %v1646, 0.0
    %v1656 = vadd.f32 %v1654, %v1655
    %v1657 = vsel %vm1468, %v1647, 0.0
    %v1658 = vadd.f32 %v1656, %v1657
    %v1659 = vsel %vm1468, %v1648, 0.0
    %v1660 = vadd.f32 %v1658, %v1659
    %v1661 = vsel %vm1468, %v1649, 0.0
    %v1662 = vadd.f32 %v1660, %v1661
    %v1663 = vsel %vm1468, %v1650, 0.0
    %v1664 = vadd.f32 %v1662, %v1663
    %v1665 = vsel %vm1468, %v1651, 0.0
    %v1666 = vadd.f32 %v1664, %v1665
    %v1667 = vrot.slane %v1666, 4
    %v1668 = vadd.f32 %v1666, %v1667
    %v1669 = vrot.slane %v1668, 2
    %v1670 = vadd.f32 %v1668, %v1669
    %v1671 = vrot.slane %v1670, 1
    %v1672 = vadd.f32 %v1670, %v1671
    %v1673 = vadd.f32 %v1621, %v1643
    %v1674 = vadd.f32 %v1622, %v1672
    %v1675 = vrcp.pop 128.0
    %v1676 = vmul.f32 128.0, %v1675
    %v1677 = vsub.f32 1.0, %v1676
    %v1678 = vmul.f32 %v1675, %v1677
    %v1679 = vadd.f32 %v1675, %v1678
    %vm1680 = vweird.f32 %v1675
    %v1681 = vsel %vm1680, %v1675, %v1679
    %v1682 = vmul.f32 %v1673, %v1681
    %v1683 = vmul.f32 %v1674, %v1681
    %v1684 = vmul.f32 %v1682, %v1682
    %v1685 = vsub.f32 %v1683, %v1684
    %v1686 = vadd.f32 %v1685, 1e-05
    %v1687 = vrsqrt.pop %v1686
    %v1688 = vmul.f32 %v1687, %v1686
    %v1689 = vmul.f32 %v1688, %v1687
    %v1690 = vmul.f32 0.5, %v1689
    %v1691 = vsub.f32 1.5, %v1690
    %v1692 = vmul.f32 %v1687, %v1691
    %vm1693 = vweird.f32 %v1686
    %vm1694 = vweird.f32 %v1687
    %vm1695 = vmor %vm1693, %vm1694
    %v1696 = vsel %vm1695, %v1687, %v1692
    %v1697 = vsub.f32 %v556, %v1682
    %v1698 = vsub.f32 %v569, %v1682
    %v1699 = vsub.f32 %v558, %v1682
    %v1700 = vsub.f32 %v570, %v1682
    %v1701 = vsub.f32 %v561, %v1682
    %v1702 = vsub.f32 %v571, %v1682
    %v1703 = vsub.f32 %v563, %v1682
    %v1704 = vsub.f32 %v572, %v1682
    %v1705 = vmul.f32 %v1697, %v1696
    %v1706 = vmul.f32 %v1698, %v1696
    %v1707 = vmul.f32 %v1699, %v1696
    %v1708 = vmul.f32 %v1700, %v1696
    %v1709 = vmul.f32 %v1701, %v1696
    %v1710 = vmul.f32 %v1702, %v1696
    %v1711 = vmul.f32 %v1703, %v1696
    %v1712 = vmul.f32 %v1704, %v1696
    %v1713 = vsub.f32 %v853, %v1682
    %v1714 = vsub.f32 %v866, %v1682
    %v1715 = vsub.f32 %v855, %v1682
    %v1716 = vsub.f32 %v867, %v1682
    %v1717 = vsub.f32 %v858, %v1682
    %v1718 = vsub.f32 %v868, %v1682
    %v1719 = vsub.f32 %v860, %v1682
    %v1720 = vsub.f32 %v869, %v1682
    %v1721 = vmul.f32 %v1713, %v1696
    %v1722 = vmul.f32 %v1714, %v1696
    %v1723 = vmul.f32 %v1715, %v1696
    %v1724 = vmul.f32 %v1716, %v1696
    %v1725 = vmul.f32 %v1717, %v1696
    %v1726 = vmul.f32 %v1718, %v1696
    %v1727 = vmul.f32 %v1719, %v1696
    %v1728 = vmul.f32 %v1720, %v1696
    %v1729 = vsub.f32 %v1150, %v1682
    %v1730 = vsub.f32 %v1163, %v1682
    %v1731 = vsub.f32 %v1152, %v1682
    %v1732 = vsub.f32 %v1164, %v1682
    %v1733 = vsub.f32 %v1155, %v1682
    %v1734 = vsub.f32 %v1165, %v1682
    %v1735 = vsub.f32 %v1157, %v1682
    %v1736 = vsub.f32 %v1166, %v1682
    %v1737 = vmul.f32 %v1729, %v1696
    %v1738 = vmul.f32 %v1730, %v1696
    %v1739 = vmul.f32 %v1731, %v1696
    %v1740 = vmul.f32 %v1732, %v1696
    %v1741 = vmul.f32 %v1733, %v1696
    %v1742 = vmul.f32 %v1734, %v1696
    %v1743 = vmul.f32 %v1735, %v1696
    %v1744 = vmul.f32 %v1736, %v1696
    %v1745 = vsub.f32 %v1447, %v1682
    %v1746 = vsub.f32 %v1460, %v1682
    %v1747 = vsub.f32 %v1449, %v1682
    %v1748 = vsub.f32 %v1461, %v1682
    %v1749 = vsub.f32 %v1452, %v1682
    %v1750 = vsub.f32 %v1462, %v1682
    %v1751 = vsub.f32 %v1454, %v1682
    %v1752 = vsub.f32 %v1463, %v1682
    %v1753 = vmul.f32 %v1745, %v1696
    %v1754 = vmul.f32 %v1746, %v1696
    %v1755 = vmul.f32 %v1747, %v1696
    %v1756 = vmul.f32 %v1748, %v1696
    %v1757 = vmul.f32 %v1749, %v1696
    %v1758 = vmul.f32 %v1750, %v1696
    %v1759 = vmul.f32 %v1751, %v1696
    %v1760 = vmul.f32 %v1752, %v1696
    %1761 = vst.msk [vmem:[#allocation4] sm:$0xf] %vm1468, %v1705
    %1762 = vst.msk [vmem:[#allocation4 + $0x4] sm:$0xf] %vm1468, %v1706
    %1763 = vst.msk [vmem:[#allocation4 + $0x8] sm:$0xf] %vm1468, %v1707
    %1764 = vst.msk [vmem:[#allocation4 + $0xc] sm:$0xf] %vm1468, %v1708
    %1765 = vst.msk [vmem:[#allocation4 + $0x10] sm:$0xf] %vm1468, %v1709
    %1766 = vst.msk [vmem:[#allocation4 + $0x14] sm:$0xf] %vm1468, %v1710
    %1767 = vst.msk [vmem:[#allocation4 + $0x18] sm:$0xf] %vm1468, %v1711
    %1768 = vst.msk [vmem:[#allocation4 + $0x1c] sm:$0xf] %vm1468, %v1712
    %s1769 = scalar_lea.vmem [#allocation4], 32
    %1770 = vst.msk [vmem:[%s1769] sm:$0xf] %vm1468, %v1721
    %1771 = vst.msk [vmem:[%s1769 + $0x4] sm:$0xf] %vm1468, %v1722
    %1772 = vst.msk [vmem:[%s1769 + $0x8] sm:$0xf] %vm1468, %v1723
    %1773 = vst.msk [vmem:[%s1769 + $0xc] sm:$0xf] %vm1468, %v1724
    %1774 = vst.msk [vmem:[%s1769 + $0x10] sm:$0xf] %vm1468, %v1725
    %1775 = vst.msk [vmem:[%s1769 + $0x14] sm:$0xf] %vm1468, %v1726
    %1776 = vst.msk [vmem:[%s1769 + $0x18] sm:$0xf] %vm1468, %v1727
    %1777 = vst.msk [vmem:[%s1769 + $0x1c] sm:$0xf] %vm1468, %v1728
    %s1778 = scalar_lea.vmem [#allocation4], 64
    %1779 = vst.msk [vmem:[%s1778] sm:$0xf] %vm1468, %v1737
    %1780 = vst.msk [vmem:[%s1778 + $0x4] sm:$0xf] %vm1468, %v1738
    %1781 = vst.msk [vmem:[%s1778 + $0x8] sm:$0xf] %vm1468, %v1739
    %1782 = vst.msk [vmem:[%s1778 + $0xc] sm:$0xf] %vm1468, %v1740
    %1783 = vst.msk [vmem:[%s1778 + $0x10] sm:$0xf] %vm1468, %v1741
    %1784 = vst.msk [vmem:[%s1778 + $0x14] sm:$0xf] %vm1468, %v1742
    %1785 = vst.msk [vmem:[%s1778 + $0x18] sm:$0xf] %vm1468, %v1743
    %1786 = vst.msk [vmem:[%s1778 + $0x1c] sm:$0xf] %vm1468, %v1744
    %s1787 = scalar_lea.vmem [#allocation4], 96
    %1788 = vst.msk [vmem:[%s1787] sm:$0xf] %vm1468, %v1753
    %1789 = vst.msk [vmem:[%s1787 + $0x4] sm:$0xf] %vm1468, %v1754
    %1790 = vst.msk [vmem:[%s1787 + $0x8] sm:$0xf] %vm1468, %v1755
    %1791 = vst.msk [vmem:[%s1787 + $0xc] sm:$0xf] %vm1468, %v1756
    %1792 = vst.msk [vmem:[%s1787 + $0x10] sm:$0xf] %vm1468, %v1757
    %1793 = vst.msk [vmem:[%s1787 + $0x14] sm:$0xf] %vm1468, %v1758
    %1794 = vst.msk [vmem:[%s1787 + $0x18] sm:$0xf] %vm1468, %v1759
    %1795 = vst.msk [vmem:[%s1787 + $0x1c] sm:$0xf] %vm1468, %v1760
    // Predicated region
    $region18: #{tpu_custom_call.1} parent=1 // pred_check
      _
    $region19: #{tpu_custom_call.1} parent=1 // pred_check_branch
      %1797 = sbr.rel (0) target = $region21
    $region20: #{tpu_custom_call.1} parent=1 // pred_region
      %1799 = vsyncadd [#allocation5], 0
      %s1800 = sshll.u32 [#allocation4], 4
      %s1801 = int_to_ptr.vmem [resolvable:$true] %s1800
      %s1802 = sshll.u32 %s4, 4
      %s1803 = int_to_ptr.hbm [resolvable:$true] %s1802
      %1808 = dma.vmem_to_hbm [thread:$0]  %s1801, 2048, %s1803, [#allocation5], 64, 64, 4
    $region21: #{tpu_custom_call.1} parent=1 // pred_fallthru
      _
    // Predicated region
    $region22: #{tpu_custom_call.1} parent=1 // pred_check
      _
    $region23: #{tpu_custom_call.1} parent=1 // pred_check_branch
      %1810 = sbr.rel (0) target = $region25
    $region24: #{tpu_custom_call.1} parent=1 // pred_region
      %1812 = dma.done [#allocation5], 2048
    $region25: #{tpu_custom_call.1} parent=1 // pred_fallthru
      _
    %1813 = vsyncpa [#allocation5], 1

</llo_original>
